<compile_context>
chip_gen: v5e
topology: v5e:2x2
jax: 0.10.0
libtpu: 0.0.40
codegen_flags: <defaults>
</compile_context>

<pallas_src>
import functools

import numpy as np
import jax
import jax.numpy as jnp
from jax.experimental import pallas as pl
from jax.experimental.pallas import tpu as pltpu


def _sss_kernel(frames_ref, dft_ref, out_ref, *, alpha, eps, tm, tn):
    k = frames_ref.shape[-1]
    # (2, TM, K) -> (2*TM, K): pred tile stacked on top of true tile.
    frames = frames_ref[...].reshape(2 * tm, k)                      # bf16
    # One MXU matmul per grid step against this freq-tile's [cos | -sin] block.
    z = jnp.dot(frames, dft_ref[...],
                preferred_element_type=jnp.float32)                  # (2*TM, 2*TN)
    zp, zt = z[:tm], z[tm:]
    re_p, im_p = zp[:, :tn], zp[:, tn:]
    re_t, im_t = zt[:, :tn], zt[:, tn:]

    s_pred = re_p * re_p + im_p * im_p                               # power spec, f32
    s_true = re_t * re_t + im_t * im_t

    linear = jnp.abs(s_pred - s_true)
    # |log2(a) - log2(b)| == |log2(a/b)|: one EUP log2 instead of two.
    # Zero-padded frames/frequencies give s_pred = s_true = 0 -> both terms 0.
    log_d = jnp.abs(jnp.log2((s_true + eps) / (s_pred + eps)))

    partial = jnp.sum(linear + alpha * log_d)
    out_ref[...] = jnp.broadcast_to(partial, out_ref.shape)


def _round_up(x, m):
    return ((x + m - 1) // m) * m


@functools.lru_cache(maxsize=None)
def _folded_dft(n_fft, tn):
    """Hann-window-folded real-DFT matrix, laid out as per-frequency-tile
    [cos | -sin] column blocks of width 2*tn, zero-padded, bf16 device array.
    Cached so the trig table is built once per n_fft."""
    n_freq = n_fft // 2 + 1
    n_pad = _round_up(n_freq, tn)
    n = np.arange(n_fft, dtype=np.float64)
    window = 0.5 - 0.5 * np.cos(2.0 * np.pi * n / n_fft)       # periodic hann
    ang = (2.0 * np.pi / n_fft) * n[:, None] * np.arange(n_freq,
                                                         dtype=np.float64)[None, :]
    w_cos = np.zeros((n_fft, n_pad), np.float32)
    w_sin = np.zeros((n_fft, n_pad), np.float32)
    w_cos[:, :n_freq] = (window[:, None] * np.cos(ang)).astype(np.float32)
    w_sin[:, :n_freq] = (window[:, None] * (-np.sin(ang))).astype(np.float32)
    nft = n_pad // tn
    dft = np.concatenate([w_cos.reshape(n_fft, nft, tn),
                          w_sin.reshape(n_fft, nft, tn)], axis=-1)
    dft = jnp.asarray(dft.reshape(n_fft, nft * 2 * tn), dtype=jnp.bfloat16)
    return dft, n_pad, nft


def _frame_signal(x, n_fft, hop, num_frames):
    """Frame a center-padded (B, L) signal into (B*num_frames, n_fft)."""
    b = x.shape[0]
    if hop > 0 and n_fft % hop == 0:
        # Every frame is r = n_fft//hop consecutive hop-chunks: r strided
        # slices + concat, no index-array gather.
        r = n_fft // hop
        needed = (num_frames - 1 + r) * hop
        xc = x[:, :needed].reshape(b, num_frames - 1 + r, hop)
        frames = jnp.concatenate([xc[:, c:c + num_frames] for c in range(r)],
                                 axis=-1)
    else:  # generic fallback
        idx = hop * jnp.arange(num_frames)[:, None] + jnp.arange(n_fft)[None, :]
        frames = x[:, idx]
    return frames.reshape(b * num_frames, n_fft)


def sss_loss(x_pred, x_true, *, n_fft, alpha=1.0, overlap=0.75, eps=1e-7,
             frame_tile=None, freq_tile=512):
    """Single-scale spectral loss matching the PyTorch SSSLoss forward."""
    assert x_pred.shape == x_true.shape and x_pred.ndim == 2
    hop = int(n_fft * (1.0 - overlap))
    assert hop >= 1
    b, t = x_pred.shape
    n_freq = n_fft // 2 + 1
    num_frames = 1 + t // hop

    # ---- frequency tiling + cached window-folded DFT matrix ---------------
    tn = _round_up(min(int(freq_tile), _round_up(n_freq, 128)), 128)
    dft, n_pad, num_freq_tiles = _folded_dft(int(n_fft), int(tn))

    # ---- glue: center (reflect) pad + strided framing in bf16 -------------
    pad = n_fft // 2
    xp = jnp.pad(x_pred, ((0, 0), (pad, pad)), mode="reflect").astype(jnp.bfloat16)
    xt = jnp.pad(x_true, ((0, 0), (pad, pad)), mode="reflect").astype(jnp.bfloat16)
    # TODO(synk): move framing fully in-kernel (memory_space=pl.ANY + manual
    # DMA of contiguous signal chunks) to avoid materializing the ~4x
    # overlapping frames array in HBM for the mem-bound small-n_fft regime.
    fp = _frame_signal(xp, n_fft, hop, num_frames)
    ft = _frame_signal(xt, n_fft, hop, num_frames)

    m = b * num_frames
    if frame_tile is None:
        # target ~4 MiB bf16 frames block (2*tm*n_fft*2 bytes), 128-aligned.
        frame_tile = max(128, min(2048, _round_up(max(1, (1 << 20) // n_fft), 128)))
    tm = _round_up(min(int(frame_tile), _round_up(m, 128)), 128)
    num_m_tiles = pl.cdiv(m, tm)
    m_pad = num_m_tiles * tm
    fp = jnp.pad(fp, ((0, m_pad - m), (0, 0)))        # zero frames contribute 0
    ft = jnp.pad(ft, ((0, m_pad - m), (0, 0)))
    frames = jnp.stack([fp, ft], axis=0)              # (2, M_pad, n_fft) bf16

    count = float(b * n_freq * num_frames)            # un-padded spectrogram size

    kernel = functools.partial(_sss_kernel, alpha=float(alpha), eps=float(eps),
                               tm=tm, tn=tn)

    # ---- VMEM budget derived from actual block sizes (v7x: 64 MiB/TC) -----
    frames_blk = 2 * tm * n_fft * 2                   # bf16
    dft_blk = n_fft * 2 * tn * 2                      # bf16
    dft_bufs = 1 if num_freq_tiles == 1 else 2
    z_bytes = (2 * tm) * (2 * tn) * 4                 # f32 epilogue intermediate
    vmem_need = (2 * frames_blk + dft_bufs * dft_blk
                 + 2 * 8 * 128 * 4 + 4 * z_bytes)
    vmem_limit = int(min(64 << 20, max(32 << 20, vmem_need + (8 << 20))))

    flops = 2 * (2 * m_pad) * n_fft * (2 * n_pad)
    bytes_accessed = int(frames.size * 2 + dft.size * 2 * num_m_tiles
                         + num_m_tiles * num_freq_tiles * 8 * 128 * 4)
    n_out = num_m_tiles * num_freq_tiles

    def build_call(dft_pipeline_mode):
        if dft_pipeline_mode is None:
            dft_spec = pl.BlockSpec((n_fft, 2 * tn), lambda i, j: (0, j))
        else:
            dft_spec = pl.BlockSpec((n_fft, 2 * tn), lambda i, j: (0, j),
                                    pipeline_mode=dft_pipeline_mode)
        return pl.pallas_call(
            kernel,
            out_shape=jax.ShapeDtypeStruct((n_out, 8, 128), jnp.float32),
            grid_spec=pltpu.PrefetchScalarGridSpec(
                num_scalar_prefetch=0,
                grid=(num_m_tiles, num_freq_tiles),
                in_specs=[
                    # frame tiles: double-buffered along the M grid axis.
                    pl.BlockSpec((2, tm, n_fft), lambda i, j: (0, i, 0)),
                    # DFT column block for this frequency tile.
                    dft_spec,
                ],
                out_specs=pl.BlockSpec(
                    (1, 8, 128),
                    lambda i, j: (i * num_freq_tiles + j, 0, 0)),
            ),
            compiler_params=pltpu.CompilerParams(
                dimension_semantics=("parallel", "parallel"),
                vmem_limit_bytes=vmem_limit),
            cost_estimate=pl.CostEstimate(
                flops=flops,
                transcendentals=2 * m_pad * n_pad,
                bytes_accessed=bytes_accessed),
        )

    if num_freq_tiles == 1:
        # Grid-constant DFT block index -> a single VMEM buffer suffices.
        try:
            partials = build_call(pl.Buffered(buffer_count=1))(frames, dft)
        except Exception:  # back-compat fallback to default double-buffering
            partials = build_call(None)(frames, dft)
    else:
        partials = build_call(None)(frames, dft)

    return jnp.sum(partials[:, 0, 0]) / count


if __name__ == "__main__":
    key = jax.random.PRNGKey(0)
    k1, k2 = jax.random.split(key)
    B, T = 2, 64
    N_FFT = 16                        # hop = 4 -> 17 frames, 9 freq bins
    x_pred = jax.random.normal(k1, (B, T), dtype=jnp.float32)
    x_true = jax.random.normal(k2, (B, T), dtype=jnp.float32)

    loss = sss_loss(x_pred, x_true, n_fft=N_FFT, alpha=1.0,
                    overlap=0.75, eps=1e-7)
    jax.block_until_ready(loss)
    assert jnp.isfinite(loss)
    print("KERNEL_OK")
</pallas_src>

<mosaic_0001>
module attributes {stable_mosaic.version = 11 : i64} {
  func.func @_sss_kernel(%arg0: i32, %arg1: i32, %arg2: memref<2x128x16xbf16, #tpu.memory_space<vmem>>, %arg3: memref<16x256xbf16, #tpu.memory_space<vmem>>, %arg4: memref<1x8x128xf32, #tpu.memory_space<vmem>>) attributes {dimension_semantics = [#tpu.dimension_semantics<parallel>, #tpu.dimension_semantics<parallel>], iteration_bounds = array<i64: 1, 1>, scalar_prefetch = 0 : i64, scratch_operands = 0 : i64, tpu.core_type = #tpu.core_type<tc>, window_params = [{transform_indices = @transform_0, window_bounds = array<i64: 2, 128, 16>}, {pipeline_mode = #tpu.pipeline_mode<synchronous>, transform_indices = @transform_1, window_bounds = array<i64: 16, 256>}, {transform_indices = @transform_2, window_bounds = array<i64: 1, 8, 128>}]} {
    %c0 = arith.constant 0 : index
    %c0_0 = arith.constant 0 : index
    %c0_1 = arith.constant 0 : index
    %0 = vector.load %arg2[%c0, %c0_0, %c0_1] : memref<2x128x16xbf16, #tpu.memory_space<vmem>>, vector<2x128x16xbf16>
    %1 = vector.shape_cast %0 : vector<2x128x16xbf16> to vector<256x16xbf16>
    %c0_2 = arith.constant 0 : index
    %c0_3 = arith.constant 0 : index
    %2 = vector.load %arg3[%c0_2, %c0_3] : memref<16x256xbf16, #tpu.memory_space<vmem>>, vector<16x256xbf16>
    %cst = arith.constant dense<0.000000e+00> : vector<256x256xf32>
    %3 = tpu.matmul %1, %2, %cst {dimension_numbers = #tpu.dot_dimension_numbers<[1], [0], [0], [1], [0, 0, 1, 1], [], []>} : vector<256x16xbf16>, vector<16x256xbf16>, vector<256x256xf32> -> vector<256x256xf32>
    %4 = vector.extract_strided_slice %3 {offsets = [0, 0], sizes = [128, 256], strides = [1, 1]} : vector<256x256xf32> to vector<128x256xf32>
    %5 = vector.extract_strided_slice %3 {offsets = [128, 0], sizes = [128, 256], strides = [1, 1]} : vector<256x256xf32> to vector<128x256xf32>
    %6 = vector.extract_strided_slice %4 {offsets = [0, 0], sizes = [128, 128], strides = [1, 1]} : vector<128x256xf32> to vector<128x128xf32>
    %7 = vector.extract_strided_slice %4 {offsets = [0, 128], sizes = [128, 128], strides = [1, 1]} : vector<128x256xf32> to vector<128x128xf32>
    %8 = vector.extract_strided_slice %5 {offsets = [0, 0], sizes = [128, 128], strides = [1, 1]} : vector<128x256xf32> to vector<128x128xf32>
    %9 = vector.extract_strided_slice %5 {offsets = [0, 128], sizes = [128, 128], strides = [1, 1]} : vector<128x256xf32> to vector<128x128xf32>
    %10 = arith.mulf %6, %6 : vector<128x128xf32>
    %11 = arith.mulf %7, %7 : vector<128x128xf32>
    %12 = arith.addf %10, %11 : vector<128x128xf32>
    %13 = arith.mulf %8, %8 : vector<128x128xf32>
    %14 = arith.mulf %9, %9 : vector<128x128xf32>
    %15 = arith.addf %13, %14 : vector<128x128xf32>
    %16 = arith.subf %12, %15 : vector<128x128xf32>
    %17 = math.absf %16 : vector<128x128xf32>
    %cst_4 = arith.constant 1.000000e-07 : f32
    %18 = vector.broadcast %cst_4 : f32 to vector<128x128xf32>
    %19 = arith.addf %15, %18 : vector<128x128xf32>
    %cst_5 = arith.constant 1.000000e-07 : f32
    %20 = vector.broadcast %cst_5 : f32 to vector<128x128xf32>
    %21 = arith.addf %12, %20 : vector<128x128xf32>
    %22 = arith.divf %19, %21 : vector<128x128xf32>
    %23 = math.log %22 : vector<128x128xf32>
    %cst_6 = arith.constant 2.000000e+00 : f32
    %24 = math.log %cst_6 : f32
    %25 = vector.broadcast %24 : f32 to vector<128x128xf32>
    %26 = arith.divf %23, %25 : vector<128x128xf32>
    %27 = math.absf %26 : vector<128x128xf32>
    %cst_7 = arith.constant 1.000000e+00 : f32
    %28 = vector.broadcast %cst_7 : f32 to vector<128x128xf32>
    %29 = arith.mulf %28, %27 : vector<128x128xf32>
    %30 = arith.addf %17, %29 : vector<128x128xf32>
    %31 = vector.shape_cast %30 : vector<128x128xf32> to vector<1x128x128xf32>
    %cst_8 = arith.constant dense<0.000000e+00> : vector<1xf32>
    %32 = vector.multi_reduction <add>, %31, %cst_8 [1, 2] : vector<1x128x128xf32> to vector<1xf32>
    %33 = vector.shape_cast %32 : vector<1xf32> to vector<1x1x1xf32>
    %34 = vector.extract %33[0, 0, 0] : f32 from vector<1x1x1xf32>
    %35 = vector.broadcast %34 : f32 to vector<1x8x128xf32>
    %c0_9 = arith.constant 0 : index
    %c0_10 = arith.constant 0 : index
    %c0_11 = arith.constant 0 : index
    %36 = vector.load %arg4[%c0_9, %c0_10, %c0_11] : memref<1x8x128xf32, #tpu.memory_space<vmem>>, vector<1x8x128xf32>
    tpu.vector_store %arg4[%c0_9, %c0_10, %c0_11], %35 {strides = array<i32>} : memref<1x8x128xf32, #tpu.memory_space<vmem>>, vector<1x8x128xf32>,
    return
  }
  func.func @transform_0(%arg0: i32, %arg1: i32) -> (i32, i32, i32) {
    %c0_i32 = arith.constant 0 : i32
    %c0_i32_0 = arith.constant 0 : i32
    %c0_i32_1 = arith.constant 0 : i32
    return %c0_i32, %arg0, %c0_i32_0 : i32, i32, i32
  }
  func.func @transform_1(%arg0: i32, %arg1: i32) -> (i32, i32) {
    %c0_i32 = arith.constant 0 : i32
    %c0_i32_0 = arith.constant 0 : i32
    return %c0_i32, %arg1 : i32, i32
  }
  func.func @transform_2(%arg0: i32, %arg1: i32) -> (i32, i32, i32) {
    %c1_i32 = arith.constant 1 : i32
    %0 = arith.muli %arg0, %c1_i32 : i32
    %1 = arith.addi %0, %arg1 : i32
    %c0_i32 = arith.constant 0 : i32
    %c0_i32_0 = arith.constant 0 : i32
    %c0_i32_1 = arith.constant 0 : i32
    return %1, %c0_i32, %c0_i32_0 : i32, i32, i32
  }
}

module attributes {stable_mosaic.version = 11 : i64} {
  func.func @_sss_kernel(%arg0: i32, %arg1: i32, %arg2: memref<2x128x16xbf16, #tpu.memory_space<vmem>>, %arg3: memref<16x256xbf16, #tpu.memory_space<vmem>>, %arg4: memref<1x8x128xf32, #tpu.memory_space<vmem>>) attributes {dimension_semantics = [#tpu.dimension_semantics<parallel>, #tpu.dimension_semantics<parallel>], iteration_bounds = array<i64: 1, 1>, scalar_prefetch = 0 : i64, scratch_operands = 0 : i64, tpu.core_type = #tpu.core_type<tc>, window_params = [{transform_indices = @transform_0, window_bounds = array<i64: 2, 128, 16>}, {transform_indices = @transform_1, window_bounds = array<i64: 16, 256>}, {transform_indices = @transform_2, window_bounds = array<i64: 1, 8, 128>}]} {
    %c0 = arith.constant 0 : index
    %c0_0 = arith.constant 0 : index
    %c0_1 = arith.constant 0 : index
    %0 = vector.load %arg2[%c0, %c0_0, %c0_1] : memref<2x128x16xbf16, #tpu.memory_space<vmem>>, vector<2x128x16xbf16>
    %1 = vector.shape_cast %0 : vector<2x128x16xbf16> to vector<256x16xbf16>
    %c0_2 = arith.constant 0 : index
    %c0_3 = arith.constant 0 : index
    %2 = vector.load %arg3[%c0_2, %c0_3] : memref<16x256xbf16, #tpu.memory_space<vmem>>, vector<16x256xbf16>
    %cst = arith.constant dense<0.000000e+00> : vector<256x256xf32>
    %3 = tpu.matmul %1, %2, %cst {dimension_numbers = #tpu.dot_dimension_numbers<[1], [0], [0], [1], [0, 0, 1, 1], [], []>} : vector<256x16xbf16>, vector<16x256xbf16>, vector<256x256xf32> -> vector<256x256xf32>
    %4 = vector.extract_strided_slice %3 {offsets = [0, 0], sizes = [128, 256], strides = [1, 1]} : vector<256x256xf32> to vector<128x256xf32>
    %5 = vector.extract_strided_slice %3 {offsets = [128, 0], sizes = [128, 256], strides = [1, 1]} : vector<256x256xf32> to vector<128x256xf32>
    %6 = vector.extract_strided_slice %4 {offsets = [0, 0], sizes = [128, 128], strides = [1, 1]} : vector<128x256xf32> to vector<128x128xf32>
    %7 = vector.extract_strided_slice %4 {offsets = [0, 128], sizes = [128, 128], strides = [1, 1]} : vector<128x256xf32> to vector<128x128xf32>
    %8 = vector.extract_strided_slice %5 {offsets = [0, 0], sizes = [128, 128], strides = [1, 1]} : vector<128x256xf32> to vector<128x128xf32>
    %9 = vector.extract_strided_slice %5 {offsets = [0, 128], sizes = [128, 128], strides = [1, 1]} : vector<128x256xf32> to vector<128x128xf32>
    %10 = arith.mulf %6, %6 : vector<128x128xf32>
    %11 = arith.mulf %7, %7 : vector<128x128xf32>
    %12 = arith.addf %10, %11 : vector<128x128xf32>
    %13 = arith.mulf %8, %8 : vector<128x128xf32>
    %14 = arith.mulf %9, %9 : vector<128x128xf32>
    %15 = arith.addf %13, %14 : vector<128x128xf32>
    %16 = arith.subf %12, %15 : vector<128x128xf32>
    %17 = math.absf %16 : vector<128x128xf32>
    %cst_4 = arith.constant 1.000000e-07 : f32
    %18 = vector.broadcast %cst_4 : f32 to vector<128x128xf32>
    %19 = arith.addf %15, %18 : vector<128x128xf32>
    %cst_5 = arith.constant 1.000000e-07 : f32
    %20 = vector.broadcast %cst_5 : f32 to vector<128x128xf32>
    %21 = arith.addf %12, %20 : vector<128x128xf32>
    %22 = arith.divf %19, %21 : vector<128x128xf32>
    %23 = math.log %22 : vector<128x128xf32>
    %cst_6 = arith.constant 2.000000e+00 : f32
    %24 = math.log %cst_6 : f32
    %25 = vector.broadcast %24 : f32 to vector<128x128xf32>
    %26 = arith.divf %23, %25 : vector<128x128xf32>
    %27 = math.absf %26 : vector<128x128xf32>
    %cst_7 = arith.constant 1.000000e+00 : f32
    %28 = vector.broadcast %cst_7 : f32 to vector<128x128xf32>
    %29 = arith.mulf %28, %27 : vector<128x128xf32>
    %30 = arith.addf %17, %29 : vector<128x128xf32>
    %31 = vector.shape_cast %30 : vector<128x128xf32> to vector<1x128x128xf32>
    %cst_8 = arith.constant dense<0.000000e+00> : vector<1xf32>
    %32 = vector.multi_reduction <add>, %31, %cst_8 [1, 2] : vector<1x128x128xf32> to vector<1xf32>
    %33 = vector.shape_cast %32 : vector<1xf32> to vector<1x1x1xf32>
    %34 = vector.extract %33[0, 0, 0] : f32 from vector<1x1x1xf32>
    %35 = vector.broadcast %34 : f32 to vector<1x8x128xf32>
    %c0_9 = arith.constant 0 : index
    %c0_10 = arith.constant 0 : index
    %c0_11 = arith.constant 0 : index
    %36 = vector.load %arg4[%c0_9, %c0_10, %c0_11] : memref<1x8x128xf32, #tpu.memory_space<vmem>>, vector<1x8x128xf32>
    tpu.vector_store %arg4[%c0_9, %c0_10, %c0_11], %35 {strides = array<i32>} : memref<1x8x128xf32, #tpu.memory_space<vmem>>, vector<1x8x128xf32>,
    return
  }
  func.func @transform_0(%arg0: i32, %arg1: i32) -> (i32, i32, i32) {
    %c0_i32 = arith.constant 0 : i32
    %c0_i32_0 = arith.constant 0 : i32
    %c0_i32_1 = arith.constant 0 : i32
    return %c0_i32, %arg0, %c0_i32_0 : i32, i32, i32
  }
  func.func @transform_1(%arg0: i32, %arg1: i32) -> (i32, i32) {
    %c0_i32 = arith.constant 0 : i32
    %c0_i32_0 = arith.constant 0 : i32
    return %c0_i32, %arg1 : i32, i32
  }
  func.func @transform_2(%arg0: i32, %arg1: i32) -> (i32, i32, i32) {
    %c1_i32 = arith.constant 1 : i32
    %0 = arith.muli %arg0, %c1_i32 : i32
    %1 = arith.addi %0, %arg1 : i32
    %c0_i32 = arith.constant 0 : i32
    %c0_i32_0 = arith.constant 0 : i32
    %c0_i32_1 = arith.constant 0 : i32
    return %1, %c0_i32, %c0_i32_0 : i32, i32, i32
  }
}

</mosaic_0001>

<llo_original>
// kernel: tpu_custom_call.1
$region0: #{tpu_custom_call.1}
  #allocation0 [shape = 'u32[]', space=smem, size = 0x4, offset = 0x4, fixed_abs, tag = 'smem constant byte address 0x4 - core index']
  #allocation1 [shape = 'u32[72,128]{1,0:T(1,128)}', space=vmem, size = 0x9000, scoped, tag = 'internal scratch']
  %s0 = inlined_call_operand.vmem [shape: bf16[2,128,16], index: 0, kind: input, shape index: {}]
  %s1 = inlined_call_operand.vmem [shape: bf16[16,256], index: 1, kind: input, shape index: {}]
  %s2 = inlined_call_operand.hbm [shape: f32[1,8,128], index: 2, kind: output, shape index: {}]
  %s3 = sld [smem:[#allocation0]]
  $region18: #{tpu_custom_call.1} parent=0
    _
  %s5 = ssub.s32 1, %s3
  %s6 = scalar_select 0, %s5, %s3
  $region1: #{tpu_custom_call.1} parent=0
    #allocation2 [shape = 'u8[4096]{0}', space=vmem, size = 0x1000, scoped, tag = 'output window, operand 0, single buffered']
    #allocation3 [shape = 's32[1]{0}', space=sflag, size = 0x4, scoped, tag = 'scoped memory for tpu_custom_call.1']
    %7 = vsyncpa [#allocation3], 0
    // Predicated region
    $region2: #{tpu_custom_call.1} parent=1 // pred_check
      _
    $region3: #{tpu_custom_call.1} parent=1 // pred_check_branch
      %9 = sbr.rel (0) target = $region5
    $region4: #{tpu_custom_call.1} parent=1 // pred_region
      _
    $region5: #{tpu_custom_call.1} parent=1 // pred_fallthru
      _
    // Predicated region
    $region6: #{tpu_custom_call.1} parent=1 // pred_check
      _
    $region7: #{tpu_custom_call.1} parent=1 // pred_check_branch
      %11 = sbr.rel (0) target = $region9
    $region8: #{tpu_custom_call.1} parent=1 // pred_region
      _
    $region9: #{tpu_custom_call.1} parent=1 // pred_fallthru
      _
    %s12 = sadd.s32 0, 0
    %v14 = vld [vmem:[%s0] sm:$0xf]
    %v15 = vld [vmem:[%s0 + $0x4] sm:$0xf]
    %v16 = vld [vmem:[%s0 + $0x8] sm:$0xf]
    %v17 = vld [vmem:[%s0 + $0xc] sm:$0xf]
    %v18 = vld [vmem:[%s0 + $0x10] sm:$0xf]
    %v19 = vld [vmem:[%s0 + $0x14] sm:$0xf]
    %v20 = vld [vmem:[%s0 + $0x18] sm:$0xf]
    %v21 = vld [vmem:[%s0 + $0x1c] sm:$0xf]
    %v22 = vld [vmem:[%s0 + $0x20] sm:$0xf]
    %v23 = vld [vmem:[%s0 + $0x24] sm:$0xf]
    %v24 = vld [vmem:[%s0 + $0x28] sm:$0xf]
    %v25 = vld [vmem:[%s0 + $0x2c] sm:$0xf]
    %v26 = vld [vmem:[%s0 + $0x30] sm:$0xf]
    %v27 = vld [vmem:[%s0 + $0x34] sm:$0xf]
    %v28 = vld [vmem:[%s0 + $0x38] sm:$0xf]
    %v29 = vld [vmem:[%s0 + $0x3c] sm:$0xf]
    %v30 = vld [vmem:[%s0 + $0x40] sm:$0xf]
    %v31 = vld [vmem:[%s0 + $0x44] sm:$0xf]
    %v32 = vld [vmem:[%s0 + $0x48] sm:$0xf]
    %v33 = vld [vmem:[%s0 + $0x4c] sm:$0xf]
    %v34 = vld [vmem:[%s0 + $0x50] sm:$0xf]
    %v35 = vld [vmem:[%s0 + $0x54] sm:$0xf]
    %v36 = vld [vmem:[%s0 + $0x58] sm:$0xf]
    %v37 = vld [vmem:[%s0 + $0x5c] sm:$0xf]
    %v38 = vld [vmem:[%s0 + $0x60] sm:$0xf]
    %v39 = vld [vmem:[%s0 + $0x64] sm:$0xf]
    %v40 = vld [vmem:[%s0 + $0x68] sm:$0xf]
    %v41 = vld [vmem:[%s0 + $0x6c] sm:$0xf]
    %v42 = vld [vmem:[%s0 + $0x70] sm:$0xf]
    %v43 = vld [vmem:[%s0 + $0x74] sm:$0xf]
    %v44 = vld [vmem:[%s0 + $0x78] sm:$0xf]
    %v45 = vld [vmem:[%s0 + $0x7c] sm:$0xf]
    %v46 = vld [vmem:[%s1] sm:$0xff]
    %v47 = vld [vmem:[%s1 + $0x8] sm:$0xff]
    %v80 = vunpack.c.l.b16 %v14
    %v81 = vunpack.c.l.b16 %v15
    %v82 = vunpack.c.l.b16 %v16
    %v83 = vunpack.c.l.b16 %v17
    %v84 = vunpack.c.l.b16 %v18
    %v85 = vunpack.c.l.b16 %v19
    %v86 = vunpack.c.l.b16 %v20
    %v87 = vunpack.c.l.b16 %v21
    %v88 = vunpack.c.l.b16 %v22
    %v89 = vunpack.c.l.b16 %v23
    %v90 = vunpack.c.l.b16 %v24
    %v91 = vunpack.c.l.b16 %v25
    %v92 = vunpack.c.l.b16 %v26
    %v93 = vunpack.c.l.b16 %v27
    %v94 = vunpack.c.l.b16 %v28
    %v95 = vunpack.c.l.b16 %v29
    %v96 = vunpack.c.l.b16 %v30
    %v97 = vunpack.c.l.b16 %v31
    %v98 = vunpack.c.l.b16 %v32
    %v99 = vunpack.c.l.b16 %v33
    %v100 = vunpack.c.l.b16 %v34
    %v101 = vunpack.c.l.b16 %v35
    %v102 = vunpack.c.l.b16 %v36
    %v103 = vunpack.c.l.b16 %v37
    %v104 = vunpack.c.l.b16 %v38
    %v105 = vunpack.c.l.b16 %v39
    %v106 = vunpack.c.l.b16 %v40
    %v107 = vunpack.c.l.b16 %v41
    %v108 = vunpack.c.l.b16 %v42
    %v109 = vunpack.c.l.b16 %v43
    %v110 = vunpack.c.l.b16 %v44
    %v111 = vunpack.c.l.b16 %v45
    %v112 = vpack.c.b16 %v81, %v80
    %v113 = vpack.c.b16 %v83, %v82
    %v114 = vpack.c.b16 %v85, %v84
    %v115 = vpack.c.b16 %v87, %v86
    %v116 = vpack.c.b16 %v89, %v88
    %v117 = vpack.c.b16 %v91, %v90
    %v118 = vpack.c.b16 %v93, %v92
    %v119 = vpack.c.b16 %v95, %v94
    %v120 = vpack.c.b16 %v97, %v96
    %v121 = vpack.c.b16 %v99, %v98
    %v122 = vpack.c.b16 %v101, %v100
    %v123 = vpack.c.b16 %v103, %v102
    %v124 = vpack.c.b16 %v105, %v104
    %v125 = vpack.c.b16 %v107, %v106
    %v126 = vpack.c.b16 %v109, %v108
    %v127 = vpack.c.b16 %v111, %v110
    %v130 = vunpack.c.l.b16 %v46
    %v131 = vunpack.c.h.b16 %v46
    %v132 = vunpack.c.l.b16 %v47
    %v133 = vunpack.c.h.b16 %v47
    %v134 = vpack.c.b16 %v132, %v130
    %v135 = vpack.c.b16 %v133, %v131
    %vm138 = vcmask 130048
    %v140 = vsel %vm138, %v112, 0
    %v143 = vsel %vm138, %v113, 0
    %v146 = vsel %vm138, %v114, 0
    %v149 = vsel %vm138, %v115, 0
    %v152 = vsel %vm138, %v116, 0
    %v155 = vsel %vm138, %v117, 0
    %v158 = vsel %vm138, %v118, 0
    %v161 = vsel %vm138, %v119, 0
    %v164 = vsel %vm138, %v120, 0
    %v167 = vsel %vm138, %v121, 0
    %v170 = vsel %vm138, %v122, 0
    %v173 = vsel %vm138, %v123, 0
    %v176 = vsel %vm138, %v124, 0
    %v179 = vsel %vm138, %v125, 0
    %v182 = vsel %vm138, %v126, 0
    %v185 = vsel %vm138, %v127, 0
    %187 = vmatpush.bf16.msra.mxu0 0
    %188 = vmatpush.bf16.msra.mxu0 0
    %189 = vmatpush.bf16.msra.mxu0 0
    %190 = vmatpush.bf16.msra.mxu0 0
    %191 = vmatpush.bf16.msra.mxu0 0
    %192 = vmatpush.bf16.msra.mxu0 0
    %193 = vmatpush.bf16.msra.mxu0 0
    %194 = vmatpush.bf16.msra.mxu0 %v134
    %195 = vmatmul.bf16.gmra.mxu0 %v140
    %v196 = vpop.f32.mrf.mxu0
    %v197 = vadd.f32 0.0, %v196
    %v198 = vpop.f32.mrf.mxu0
    %v199 = vadd.f32 0.0, %v198
    %200 = vmatmul.bf16.gmra.mxu0 %v143
    %v201 = vpop.f32.mrf.mxu0
    %v202 = vadd.f32 0.0, %v201
    %v203 = vpop.f32.mrf.mxu0
    %v204 = vadd.f32 0.0, %v203
    %205 = vmatmul.bf16.gmra.mxu0 %v146
    %v206 = vpop.f32.mrf.mxu0
    %v207 = vadd.f32 0.0, %v206
    %v208 = vpop.f32.mrf.mxu0
    %v209 = vadd.f32 0.0, %v208
    %210 = vmatmul.bf16.gmra.mxu0 %v149
    %v211 = vpop.f32.mrf.mxu0
    %v212 = vadd.f32 0.0, %v211
    %v213 = vpop.f32.mrf.mxu0
    %v214 = vadd.f32 0.0, %v213
    %215 = vmatmul.bf16.gmra.mxu0 %v152
    %v216 = vpop.f32.mrf.mxu0
    %v217 = vadd.f32 0.0, %v216
    %v218 = vpop.f32.mrf.mxu0
    %v219 = vadd.f32 0.0, %v218
    %220 = vmatmul.bf16.gmra.mxu0 %v155
    %v221 = vpop.f32.mrf.mxu0
    %v222 = vadd.f32 0.0, %v221
    %v223 = vpop.f32.mrf.mxu0
    %v224 = vadd.f32 0.0, %v223
    %225 = vmatmul.bf16.gmra.mxu0 %v158
    %v226 = vpop.f32.mrf.mxu0
    %v227 = vadd.f32 0.0, %v226
    %v228 = vpop.f32.mrf.mxu0
    %v229 = vadd.f32 0.0, %v228
    %230 = vmatmul.bf16.gmra.mxu0 %v161
    %v231 = vpop.f32.mrf.mxu0
    %v232 = vadd.f32 0.0, %v231
    %v233 = vpop.f32.mrf.mxu0
    %v234 = vadd.f32 0.0, %v233
    %235 = vmatmul.bf16.gmra.mxu0 %v164
    %v236 = vpop.f32.mrf.mxu0
    %v237 = vadd.f32 0.0, %v236
    %v238 = vpop.f32.mrf.mxu0
    %v239 = vadd.f32 0.0, %v238
    %240 = vmatmul.bf16.gmra.mxu0 %v167
    %v241 = vpop.f32.mrf.mxu0
    %v242 = vadd.f32 0.0, %v241
    %v243 = vpop.f32.mrf.mxu0
    %v244 = vadd.f32 0.0, %v243
    %245 = vmatmul.bf16.gmra.mxu0 %v170
    %v246 = vpop.f32.mrf.mxu0
    %v247 = vadd.f32 0.0, %v246
    %v248 = vpop.f32.mrf.mxu0
    %v249 = vadd.f32 0.0, %v248
    %250 = vmatmul.bf16.gmra.mxu0 %v173
    %v251 = vpop.f32.mrf.mxu0
    %v252 = vadd.f32 0.0, %v251
    %v253 = vpop.f32.mrf.mxu0
    %v254 = vadd.f32 0.0, %v253
    %255 = vmatmul.bf16.gmra.mxu0 %v176
    %v256 = vpop.f32.mrf.mxu0
    %v257 = vadd.f32 0.0, %v256
    %v258 = vpop.f32.mrf.mxu0
    %v259 = vadd.f32 0.0, %v258
    %260 = vmatmul.bf16.gmra.mxu0 %v179
    %v261 = vpop.f32.mrf.mxu0
    %v262 = vadd.f32 0.0, %v261
    %v263 = vpop.f32.mrf.mxu0
    %v264 = vadd.f32 0.0, %v263
    %265 = vmatmul.bf16.gmra.mxu0 %v182
    %v266 = vpop.f32.mrf.mxu0
    %v267 = vadd.f32 0.0, %v266
    %v268 = vpop.f32.mrf.mxu0
    %v269 = vadd.f32 0.0, %v268
    %270 = vmatmul.bf16.gmra.mxu0 %v185
    %v271 = vpop.f32.mrf.mxu0
    %v272 = vadd.f32 0.0, %v271
    %v273 = vpop.f32.mrf.mxu0
    %v274 = vadd.f32 0.0, %v273
    %275 = vdwg.mxu0
    %276 = vmatpush.bf16.msra.mxu0 0
    %277 = vmatpush.bf16.msra.mxu0 0
    %278 = vmatpush.bf16.msra.mxu0 0
    %279 = vmatpush.bf16.msra.mxu0 0
    %280 = vmatpush.bf16.msra.mxu0 0
    %281 = vmatpush.bf16.msra.mxu0 0
    %282 = vmatpush.bf16.msra.mxu0 0
    %283 = vmatpush.bf16.msra.mxu0 %v135
    %284 = vmatmul.bf16.gmra.mxu0 %v140
    %v285 = vpop.f32.mrf.mxu0
    %v286 = vadd.f32 0.0, %v285
    %v287 = vpop.f32.mrf.mxu0
    %v288 = vadd.f32 0.0, %v287
    %289 = vmatmul.bf16.gmra.mxu0 %v143
    %v290 = vpop.f32.mrf.mxu0
    %v291 = vadd.f32 0.0, %v290
    %v292 = vpop.f32.mrf.mxu0
    %v293 = vadd.f32 0.0, %v292
    %294 = vmatmul.bf16.gmra.mxu0 %v146
    %v295 = vpop.f32.mrf.mxu0
    %v296 = vadd.f32 0.0, %v295
    %v297 = vpop.f32.mrf.mxu0
    %v298 = vadd.f32 0.0, %v297
    %299 = vmatmul.bf16.gmra.mxu0 %v149
    %v300 = vpop.f32.mrf.mxu0
    %v301 = vadd.f32 0.0, %v300
    %v302 = vpop.f32.mrf.mxu0
    %v303 = vadd.f32 0.0, %v302
    %304 = vmatmul.bf16.gmra.mxu0 %v152
    %v305 = vpop.f32.mrf.mxu0
    %v306 = vadd.f32 0.0, %v305
    %v307 = vpop.f32.mrf.mxu0
    %v308 = vadd.f32 0.0, %v307
    %309 = vmatmul.bf16.gmra.mxu0 %v155
    %v310 = vpop.f32.mrf.mxu0
    %v311 = vadd.f32 0.0, %v310
    %v312 = vpop.f32.mrf.mxu0
    %v313 = vadd.f32 0.0, %v312
    %314 = vmatmul.bf16.gmra.mxu0 %v158
    %v315 = vpop.f32.mrf.mxu0
    %v316 = vadd.f32 0.0, %v315
    %v317 = vpop.f32.mrf.mxu0
    %v318 = vadd.f32 0.0, %v317
    %319 = vmatmul.bf16.gmra.mxu0 %v161
    %v320 = vpop.f32.mrf.mxu0
    %v321 = vadd.f32 0.0, %v320
    %v322 = vpop.f32.mrf.mxu0
    %v323 = vadd.f32 0.0, %v322
    %324 = vmatmul.bf16.gmra.mxu0 %v164
    %v325 = vpop.f32.mrf.mxu0
    %v326 = vadd.f32 0.0, %v325
    %v327 = vpop.f32.mrf.mxu0
    %v328 = vadd.f32 0.0, %v327
    %329 = vmatmul.bf16.gmra.mxu0 %v167
    %v330 = vpop.f32.mrf.mxu0
    %v331 = vadd.f32 0.0, %v330
    %v332 = vpop.f32.mrf.mxu0
    %v333 = vadd.f32 0.0, %v332
    %334 = vmatmul.bf16.gmra.mxu0 %v170
    %v335 = vpop.f32.mrf.mxu0
    %v336 = vadd.f32 0.0, %v335
    %v337 = vpop.f32.mrf.mxu0
    %v338 = vadd.f32 0.0, %v337
    %339 = vmatmul.bf16.gmra.mxu0 %v173
    %v340 = vpop.f32.mrf.mxu0
    %v341 = vadd.f32 0.0, %v340
    %v342 = vpop.f32.mrf.mxu0
    %v343 = vadd.f32 0.0, %v342
    %344 = vmatmul.bf16.gmra.mxu0 %v176
    %v345 = vpop.f32.mrf.mxu0
    %v346 = vadd.f32 0.0, %v345
    %v347 = vpop.f32.mrf.mxu0
    %v348 = vadd.f32 0.0, %v347
    %349 = vmatmul.bf16.gmra.mxu0 %v179
    %v350 = vpop.f32.mrf.mxu0
    %v351 = vadd.f32 0.0, %v350
    %v352 = vpop.f32.mrf.mxu0
    %v353 = vadd.f32 0.0, %v352
    %354 = vmatmul.bf16.gmra.mxu0 %v182
    %v355 = vpop.f32.mrf.mxu0
    %v356 = vadd.f32 0.0, %v355
    %v357 = vpop.f32.mrf.mxu0
    %v358 = vadd.f32 0.0, %v357
    %359 = vmatmul.bf16.gmra.mxu0 %v185
    %v360 = vpop.f32.mrf.mxu0
    %v361 = vadd.f32 0.0, %v360
    %v362 = vpop.f32.mrf.mxu0
    %v363 = vadd.f32 0.0, %v362
    %364 = vdwg.mxu0
    %v365 = vmul.f32 %v197, %v197
    %v366 = vmul.f32 %v199, %v199
    %v367 = vmul.f32 %v202, %v202
    %v368 = vmul.f32 %v204, %v204
    %v369 = vmul.f32 %v207, %v207
    %v370 = vmul.f32 %v209, %v209
    %v371 = vmul.f32 %v212, %v212
    %v372 = vmul.f32 %v214, %v214
    %v373 = vmul.f32 %v217, %v217
    %v374 = vmul.f32 %v219, %v219
    %v375 = vmul.f32 %v222, %v222
    %v376 = vmul.f32 %v224, %v224
    %v377 = vmul.f32 %v227, %v227
    %v378 = vmul.f32 %v229, %v229
    %v379 = vmul.f32 %v232, %v232
    %v380 = vmul.f32 %v234, %v234
    %v381 = vmul.f32 %v286, %v286
    %v382 = vmul.f32 %v288, %v288
    %v383 = vmul.f32 %v291, %v291
    %v384 = vmul.f32 %v293, %v293
    %v385 = vmul.f32 %v296, %v296
    %v386 = vmul.f32 %v298, %v298
    %v387 = vmul.f32 %v301, %v301
    %v388 = vmul.f32 %v303, %v303
    %v389 = vmul.f32 %v306, %v306
    %v390 = vmul.f32 %v308, %v308
    %v391 = vmul.f32 %v311, %v311
    %v392 = vmul.f32 %v313, %v313
    %v393 = vmul.f32 %v316, %v316
    %v394 = vmul.f32 %v318, %v318
    %v395 = vmul.f32 %v321, %v321
    %v396 = vmul.f32 %v323, %v323
    %v397 = vadd.f32 %v365, %v381
    %v398 = vadd.f32 %v366, %v382
    %v399 = vadd.f32 %v367, %v383
    %v400 = vadd.f32 %v368, %v384
    %v401 = vadd.f32 %v369, %v385
    %v402 = vadd.f32 %v370, %v386
    %v403 = vadd.f32 %v371, %v387
    %v404 = vadd.f32 %v372, %v388
    %v405 = vadd.f32 %v373, %v389
    %v406 = vadd.f32 %v374, %v390
    %v407 = vadd.f32 %v375, %v391
    %v408 = vadd.f32 %v376, %v392
    %v409 = vadd.f32 %v377, %v393
    %v410 = vadd.f32 %v378, %v394
    %v411 = vadd.f32 %v379, %v395
    %v412 = vadd.f32 %v380, %v396
    %v413 = vmul.f32 %v237, %v237
    %v414 = vmul.f32 %v239, %v239
    %v415 = vmul.f32 %v242, %v242
    %v416 = vmul.f32 %v244, %v244
    %v417 = vmul.f32 %v247, %v247
    %v418 = vmul.f32 %v249, %v249
    %v419 = vmul.f32 %v252, %v252
    %v420 = vmul.f32 %v254, %v254
    %v421 = vmul.f32 %v257, %v257
    %v422 = vmul.f32 %v259, %v259
    %v423 = vmul.f32 %v262, %v262
    %v424 = vmul.f32 %v264, %v264
    %v425 = vmul.f32 %v267, %v267
    %v426 = vmul.f32 %v269, %v269
    %v427 = vmul.f32 %v272, %v272
    %v428 = vmul.f32 %v274, %v274
    %v429 = vmul.f32 %v326, %v326
    %v430 = vmul.f32 %v328, %v328
    %v431 = vmul.f32 %v331, %v331
    %v432 = vmul.f32 %v333, %v333
    %v433 = vmul.f32 %v336, %v336
    %v434 = vmul.f32 %v338, %v338
    %v435 = vmul.f32 %v341, %v341
    %v436 = vmul.f32 %v343, %v343
    %v437 = vmul.f32 %v346, %v346
    %v438 = vmul.f32 %v348, %v348
    %v439 = vmul.f32 %v351, %v351
    %v440 = vmul.f32 %v353, %v353
    %v441 = vmul.f32 %v356, %v356
    %v442 = vmul.f32 %v358, %v358
    %v443 = vmul.f32 %v361, %v361
    %v444 = vmul.f32 %v363, %v363
    %v445 = vadd.f32 %v413, %v429
    %v446 = vadd.f32 %v414, %v430
    %v447 = vadd.f32 %v415, %v431
    %v448 = vadd.f32 %v416, %v432
    %v449 = vadd.f32 %v417, %v433
    %v450 = vadd.f32 %v418, %v434
    %v451 = vadd.f32 %v419, %v435
    %v452 = vadd.f32 %v420, %v436
    %v453 = vadd.f32 %v421, %v437
    %v454 = vadd.f32 %v422, %v438
    %v455 = vadd.f32 %v423, %v439
    %v456 = vadd.f32 %v424, %v440
    %v457 = vadd.f32 %v425, %v441
    %v458 = vadd.f32 %v426, %v442
    %v459 = vadd.f32 %v427, %v443
    %v460 = vadd.f32 %v428, %v444
    %v461 = vsub.f32 %v397, %v445
    %v462 = vsub.f32 %v398, %v446
    %v463 = vsub.f32 %v399, %v447
    %v464 = vsub.f32 %v400, %v448
    %v465 = vsub.f32 %v401, %v449
    %v466 = vsub.f32 %v402, %v450
    %v467 = vsub.f32 %v403, %v451
    %v468 = vsub.f32 %v404, %v452
    %v469 = vsub.f32 %v405, %v453
    %v470 = vsub.f32 %v406, %v454
    %v471 = vsub.f32 %v407, %v455
    %v472 = vsub.f32 %v408, %v456
    %v473 = vsub.f32 %v409, %v457
    %v474 = vsub.f32 %v410, %v458
    %v475 = vsub.f32 %v411, %v459
    %v476 = vsub.f32 %v412, %v460
    %v477 = vand.u32 2147483647, %v461
    %v478 = vand.u32 2147483647, %v462
    %v479 = vand.u32 2147483647, %v463
    %v480 = vand.u32 2147483647, %v464
    %v481 = vand.u32 2147483647, %v465
    %v482 = vand.u32 2147483647, %v466
    %v483 = vand.u32 2147483647, %v467
    %v484 = vand.u32 2147483647, %v468
    %v485 = vand.u32 2147483647, %v469
    %v486 = vand.u32 2147483647, %v470
    %v487 = vand.u32 2147483647, %v471
    %v488 = vand.u32 2147483647, %v472
    %v489 = vand.u32 2147483647, %v473
    %v490 = vand.u32 2147483647, %v474
    %v491 = vand.u32 2147483647, %v475
    %v492 = vand.u32 2147483647, %v476
    %v493 = vadd.f32 %v445, 1e-07
    %v494 = vadd.f32 %v446, 1e-07
    %v495 = vadd.f32 %v447, 1e-07
    %v496 = vadd.f32 %v448, 1e-07
    %v497 = vadd.f32 %v449, 1e-07
    %v498 = vadd.f32 %v450, 1e-07
    %v499 = vadd.f32 %v451, 1e-07
    %v500 = vadd.f32 %v452, 1e-07
    %v501 = vadd.f32 %v453, 1e-07
    %v502 = vadd.f32 %v454, 1e-07
    %v503 = vadd.f32 %v455, 1e-07
    %v504 = vadd.f32 %v456, 1e-07
    %v505 = vadd.f32 %v457, 1e-07
    %v506 = vadd.f32 %v458, 1e-07
    %v507 = vadd.f32 %v459, 1e-07
    %v508 = vadd.f32 %v460, 1e-07
    %v509 = vadd.f32 %v397, 1e-07
    %v510 = vadd.f32 %v398, 1e-07
    %v511 = vadd.f32 %v399, 1e-07
    %v512 = vadd.f32 %v400, 1e-07
    %v513 = vadd.f32 %v401, 1e-07
    %v514 = vadd.f32 %v402, 1e-07
    %v515 = vadd.f32 %v403, 1e-07
    %v516 = vadd.f32 %v404, 1e-07
    %v517 = vadd.f32 %v405, 1e-07
    %v518 = vadd.f32 %v406, 1e-07
    %v519 = vadd.f32 %v407, 1e-07
    %v520 = vadd.f32 %v408, 1e-07
    %v521 = vadd.f32 %v409, 1e-07
    %v522 = vadd.f32 %v410, 1e-07
    %v523 = vadd.f32 %v411, 1e-07
    %v524 = vadd.f32 %v412, 1e-07
    %v525 = vrcp.pop %v509
    %v526 = vmul.f32 %v509, %v525
    %v527 = vsub.f32 1.0, %v526
    %v528 = vmul.f32 %v525, %v527
    %v529 = vadd.f32 %v525, %v528
    %vm530 = vweird.f32 %v509
    %vm531 = vweird.f32 %v525
    %vm532 = vmor %vm530, %vm531
    %v533 = vsel %vm532, %v525, %v529
    %v534 = vand.u32 2147483647, %v509
    %vm535 = vcmp.eq.f32.partialorder %v534, 8.507059e+37
    %v536 = vand.u32 %v509, 2147483648
    %v537 = vor.u32 1.1754944e-38, %v536
    %v538 = vsel %vm535, %v537, %v533
    %v539 = vmul.f32 %v493, %v538
    %v540 = vrcp.pop %v510
    %v541 = vmul.f32 %v510, %v540
    %v542 = vsub.f32 1.0, %v541
    %v543 = vmul.f32 %v540, %v542
    %v544 = vadd.f32 %v540, %v543
    %vm545 = vweird.f32 %v510
    %vm546 = vweird.f32 %v540
    %vm547 = vmor %vm545, %vm546
    %v548 = vsel %vm547, %v540, %v544
    %v549 = vand.u32 2147483647, %v510
    %vm550 = vcmp.eq.f32.partialorder %v549, 8.507059e+37
    %v551 = vand.u32 %v510, 2147483648
    %v552 = vor.u32 1.1754944e-38, %v551
    %v553 = vsel %vm550, %v552, %v548
    %v554 = vmul.f32 %v494, %v553
    %v555 = vrcp.pop %v511
    %v556 = vmul.f32 %v511, %v555
    %v557 = vsub.f32 1.0, %v556
    %v558 = vmul.f32 %v555, %v557
    %v559 = vadd.f32 %v555, %v558
    %vm560 = vweird.f32 %v511
    %vm561 = vweird.f32 %v555
    %vm562 = vmor %vm560, %vm561
    %v563 = vsel %vm562, %v555, %v559
    %v564 = vand.u32 2147483647, %v511
    %vm565 = vcmp.eq.f32.partialorder %v564, 8.507059e+37
    %v566 = vand.u32 %v511, 2147483648
    %v567 = vor.u32 1.1754944e-38, %v566
    %v568 = vsel %vm565, %v567, %v563
    %v569 = vmul.f32 %v495, %v568
    %v570 = vrcp.pop %v512
    %v571 = vmul.f32 %v512, %v570
    %v572 = vsub.f32 1.0, %v571
    %v573 = vmul.f32 %v570, %v572
    %v574 = vadd.f32 %v570, %v573
    %vm575 = vweird.f32 %v512
    %vm576 = vweird.f32 %v570
    %vm577 = vmor %vm575, %vm576
    %v578 = vsel %vm577, %v570, %v574
    %v579 = vand.u32 2147483647, %v512
    %vm580 = vcmp.eq.f32.partialorder %v579, 8.507059e+37
    %v581 = vand.u32 %v512, 2147483648
    %v582 = vor.u32 1.1754944e-38, %v581
    %v583 = vsel %vm580, %v582, %v578
    %v584 = vmul.f32 %v496, %v583
    %v585 = vrcp.pop %v513
    %v586 = vmul.f32 %v513, %v585
    %v587 = vsub.f32 1.0, %v586
    %v588 = vmul.f32 %v585, %v587
    %v589 = vadd.f32 %v585, %v588
    %vm590 = vweird.f32 %v513
    %vm591 = vweird.f32 %v585
    %vm592 = vmor %vm590, %vm591
    %v593 = vsel %vm592, %v585, %v589
    %v594 = vand.u32 2147483647, %v513
    %vm595 = vcmp.eq.f32.partialorder %v594, 8.507059e+37
    %v596 = vand.u32 %v513, 2147483648
    %v597 = vor.u32 1.1754944e-38, %v596
    %v598 = vsel %vm595, %v597, %v593
    %v599 = vmul.f32 %v497, %v598
    %v600 = vrcp.pop %v514
    %v601 = vmul.f32 %v514, %v600
    %v602 = vsub.f32 1.0, %v601
    %v603 = vmul.f32 %v600, %v602
    %v604 = vadd.f32 %v600, %v603
    %vm605 = vweird.f32 %v514
    %vm606 = vweird.f32 %v600
    %vm607 = vmor %vm605, %vm606
    %v608 = vsel %vm607, %v600, %v604
    %v609 = vand.u32 2147483647, %v514
    %vm610 = vcmp.eq.f32.partialorder %v609, 8.507059e+37
    %v611 = vand.u32 %v514, 2147483648
    %v612 = vor.u32 1.1754944e-38, %v611
    %v613 = vsel %vm610, %v612, %v608
    %v614 = vmul.f32 %v498, %v613
    %v615 = vrcp.pop %v515
    %v616 = vmul.f32 %v515, %v615
    %v617 = vsub.f32 1.0, %v616
    %v618 = vmul.f32 %v615, %v617
    %v619 = vadd.f32 %v615, %v618
    %vm620 = vweird.f32 %v515
    %vm621 = vweird.f32 %v615
    %vm622 = vmor %vm620, %vm621
    %v623 = vsel %vm622, %v615, %v619
    %v624 = vand.u32 2147483647, %v515
    %vm625 = vcmp.eq.f32.partialorder %v624, 8.507059e+37
    %v626 = vand.u32 %v515, 2147483648
    %v627 = vor.u32 1.1754944e-38, %v626
    %v628 = vsel %vm625, %v627, %v623
    %v629 = vmul.f32 %v499, %v628
    %v630 = vrcp.pop %v516
    %v631 = vmul.f32 %v516, %v630
    %v632 = vsub.f32 1.0, %v631
    %v633 = vmul.f32 %v630, %v632
    %v634 = vadd.f32 %v630, %v633
    %vm635 = vweird.f32 %v516
    %vm636 = vweird.f32 %v630
    %vm637 = vmor %vm635, %vm636
    %v638 = vsel %vm637, %v630, %v634
    %v639 = vand.u32 2147483647, %v516
    %vm640 = vcmp.eq.f32.partialorder %v639, 8.507059e+37
    %v641 = vand.u32 %v516, 2147483648
    %v642 = vor.u32 1.1754944e-38, %v641
    %v643 = vsel %vm640, %v642, %v638
    %v644 = vmul.f32 %v500, %v643
    %v645 = vrcp.pop %v517
    %v646 = vmul.f32 %v517, %v645
    %v647 = vsub.f32 1.0, %v646
    %v648 = vmul.f32 %v645, %v647
    %v649 = vadd.f32 %v645, %v648
    %vm650 = vweird.f32 %v517
    %vm651 = vweird.f32 %v645
    %vm652 = vmor %vm650, %vm651
    %v653 = vsel %vm652, %v645, %v649
    %v654 = vand.u32 2147483647, %v517
    %vm655 = vcmp.eq.f32.partialorder %v654, 8.507059e+37
    %v656 = vand.u32 %v517, 2147483648
    %v657 = vor.u32 1.1754944e-38, %v656
    %v658 = vsel %vm655, %v657, %v653
    %v659 = vmul.f32 %v501, %v658
    %v660 = vrcp.pop %v518
    %v661 = vmul.f32 %v518, %v660
    %v662 = vsub.f32 1.0, %v661
    %v663 = vmul.f32 %v660, %v662
    %v664 = vadd.f32 %v660, %v663
    %vm665 = vweird.f32 %v518
    %vm666 = vweird.f32 %v660
    %vm667 = vmor %vm665, %vm666
    %v668 = vsel %vm667, %v660, %v664
    %v669 = vand.u32 2147483647, %v518
    %vm670 = vcmp.eq.f32.partialorder %v669, 8.507059e+37
    %v671 = vand.u32 %v518, 2147483648
    %v672 = vor.u32 1.1754944e-38, %v671
    %v673 = vsel %vm670, %v672, %v668
    %v674 = vmul.f32 %v502, %v673
    %v675 = vrcp.pop %v519
    %v676 = vmul.f32 %v519, %v675
    %v677 = vsub.f32 1.0, %v676
    %v678 = vmul.f32 %v675, %v677
    %v679 = vadd.f32 %v675, %v678
    %vm680 = vweird.f32 %v519
    %vm681 = vweird.f32 %v675
    %vm682 = vmor %vm680, %vm681
    %v683 = vsel %vm682, %v675, %v679
    %v684 = vand.u32 2147483647, %v519
    %vm685 = vcmp.eq.f32.partialorder %v684, 8.507059e+37
    %v686 = vand.u32 %v519, 2147483648
    %v687 = vor.u32 1.1754944e-38, %v686
    %v688 = vsel %vm685, %v687, %v683
    %v689 = vmul.f32 %v503, %v688
    %v690 = vrcp.pop %v520
    %v691 = vmul.f32 %v520, %v690
    %v692 = vsub.f32 1.0, %v691
    %v693 = vmul.f32 %v690, %v692
    %v694 = vadd.f32 %v690, %v693
    %vm695 = vweird.f32 %v520
    %vm696 = vweird.f32 %v690
    %vm697 = vmor %vm695, %vm696
    %v698 = vsel %vm697, %v690, %v694
    %v699 = vand.u32 2147483647, %v520
    %vm700 = vcmp.eq.f32.partialorder %v699, 8.507059e+37
    %v701 = vand.u32 %v520, 2147483648
    %v702 = vor.u32 1.1754944e-38, %v701
    %v703 = vsel %vm700, %v702, %v698
    %v704 = vmul.f32 %v504, %v703
    %v705 = vrcp.pop %v521
    %v706 = vmul.f32 %v521, %v705
    %v707 = vsub.f32 1.0, %v706
    %v708 = vmul.f32 %v705, %v707
    %v709 = vadd.f32 %v705, %v708
    %vm710 = vweird.f32 %v521
    %vm711 = vweird.f32 %v705
    %vm712 = vmor %vm710, %vm711
    %v713 = vsel %vm712, %v705, %v709
    %v714 = vand.u32 2147483647, %v521
    %vm715 = vcmp.eq.f32.partialorder %v714, 8.507059e+37
    %v716 = vand.u32 %v521, 2147483648
    %v717 = vor.u32 1.1754944e-38, %v716
    %v718 = vsel %vm715, %v717, %v713
    %v719 = vmul.f32 %v505, %v718
    %v720 = vrcp.pop %v522
    %v721 = vmul.f32 %v522, %v720
    %v722 = vsub.f32 1.0, %v721
    %v723 = vmul.f32 %v720, %v722
    %v724 = vadd.f32 %v720, %v723
    %vm725 = vweird.f32 %v522
    %vm726 = vweird.f32 %v720
    %vm727 = vmor %vm725, %vm726
    %v728 = vsel %vm727, %v720, %v724
    %v729 = vand.u32 2147483647, %v522
    %vm730 = vcmp.eq.f32.partialorder %v729, 8.507059e+37
    %v731 = vand.u32 %v522, 2147483648
    %v732 = vor.u32 1.1754944e-38, %v731
    %v733 = vsel %vm730, %v732, %v728
    %v734 = vmul.f32 %v506, %v733
    %v735 = vrcp.pop %v523
    %v736 = vmul.f32 %v523, %v735
    %v737 = vsub.f32 1.0, %v736
    %v738 = vmul.f32 %v735, %v737
    %v739 = vadd.f32 %v735, %v738
    %vm740 = vweird.f32 %v523
    %vm741 = vweird.f32 %v735
    %vm742 = vmor %vm740, %vm741
    %v743 = vsel %vm742, %v735, %v739
    %v744 = vand.u32 2147483647, %v523
    %vm745 = vcmp.eq.f32.partialorder %v744, 8.507059e+37
    %v746 = vand.u32 %v523, 2147483648
    %v747 = vor.u32 1.1754944e-38, %v746
    %v748 = vsel %vm745, %v747, %v743
    %v749 = vmul.f32 %v507, %v748
    %v750 = vrcp.pop %v524
    %v751 = vmul.f32 %v524, %v750
    %v752 = vsub.f32 1.0, %v751
    %v753 = vmul.f32 %v750, %v752
    %v754 = vadd.f32 %v750, %v753
    %vm755 = vweird.f32 %v524
    %vm756 = vweird.f32 %v750
    %vm757 = vmor %vm755, %vm756
    %v758 = vsel %vm757, %v750, %v754
    %v759 = vand.u32 2147483647, %v524
    %vm760 = vcmp.eq.f32.partialorder %v759, 8.507059e+37
    %v761 = vand.u32 %v524, 2147483648
    %v762 = vor.u32 1.1754944e-38, %v761
    %v763 = vsel %vm760, %v762, %v758
    %v764 = vmul.f32 %v508, %v763
    %v765 = vlog2.pop %v539
    %v766 = vmul.f32 %v765, 0.6931472
    %v767 = vlog2.pop %v554
    %v768 = vmul.f32 %v767, 0.6931472
    %v769 = vlog2.pop %v569
    %v770 = vmul.f32 %v769, 0.6931472
    %v771 = vlog2.pop %v584
    %v772 = vmul.f32 %v771, 0.6931472
    %v773 = vlog2.pop %v599
    %v774 = vmul.f32 %v773, 0.6931472
    %v775 = vlog2.pop %v614
    %v776 = vmul.f32 %v775, 0.6931472
    %v777 = vlog2.pop %v629
    %v778 = vmul.f32 %v777, 0.6931472
    %v779 = vlog2.pop %v644
    %v780 = vmul.f32 %v779, 0.6931472
    %v781 = vlog2.pop %v659
    %v782 = vmul.f32 %v781, 0.6931472
    %v783 = vlog2.pop %v674
    %v784 = vmul.f32 %v783, 0.6931472
    %v785 = vlog2.pop %v689
    %v786 = vmul.f32 %v785, 0.6931472
    %v787 = vlog2.pop %v704
    %v788 = vmul.f32 %v787, 0.6931472
    %v789 = vlog2.pop %v719
    %v790 = vmul.f32 %v789, 0.6931472
    %v791 = vlog2.pop %v734
    %v792 = vmul.f32 %v791, 0.6931472
    %v793 = vlog2.pop %v749
    %v794 = vmul.f32 %v793, 0.6931472
    %v795 = vlog2.pop %v764
    %v796 = vmul.f32 %v795, 0.6931472
    %v797 = vrcp.pop 0.6931472
    %v798 = vmul.f32 0.6931472, %v797
    %v799 = vsub.f32 1.0, %v798
    %v800 = vmul.f32 %v797, %v799
    %v801 = vadd.f32 %v797, %v800
    %vm802 = vweird.f32 %v797
    %v803 = vsel %vm802, %v797, %v801
    %v804 = vmul.f32 %v766, %v803
    %v805 = vmul.f32 %v768, %v803
    %v806 = vmul.f32 %v770, %v803
    %v807 = vmul.f32 %v772, %v803
    %v808 = vmul.f32 %v774, %v803
    %v809 = vmul.f32 %v776, %v803
    %v810 = vmul.f32 %v778, %v803
    %v811 = vmul.f32 %v780, %v803
    %v812 = vmul.f32 %v782, %v803
    %v813 = vmul.f32 %v784, %v803
    %v814 = vmul.f32 %v786, %v803
    %v815 = vmul.f32 %v788, %v803
    %v816 = vmul.f32 %v790, %v803
    %v817 = vmul.f32 %v792, %v803
    %v818 = vmul.f32 %v794, %v803
    %v819 = vmul.f32 %v796, %v803
    %v820 = vand.u32 2147483647, %v804
    %v821 = vand.u32 2147483647, %v805
    %v822 = vand.u32 2147483647, %v806
    %v823 = vand.u32 2147483647, %v807
    %v824 = vand.u32 2147483647, %v808
    %v825 = vand.u32 2147483647, %v809
    %v826 = vand.u32 2147483647, %v810
    %v827 = vand.u32 2147483647, %v811
    %v828 = vand.u32 2147483647, %v812
    %v829 = vand.u32 2147483647, %v813
    %v830 = vand.u32 2147483647, %v814
    %v831 = vand.u32 2147483647, %v815
    %v832 = vand.u32 2147483647, %v816
    %v833 = vand.u32 2147483647, %v817
    %v834 = vand.u32 2147483647, %v818
    %v835 = vand.u32 2147483647, %v819
    %v836 = vadd.f32 %v477, %v820
    %v837 = vadd.f32 %v478, %v821
    %v838 = vadd.f32 %v479, %v822
    %v839 = vadd.f32 %v480, %v823
    %v840 = vadd.f32 %v481, %v824
    %v841 = vadd.f32 %v482, %v825
    %v842 = vadd.f32 %v483, %v826
    %v843 = vadd.f32 %v484, %v827
    %v844 = vadd.f32 %v485, %v828
    %v845 = vadd.f32 %v486, %v829
    %v846 = vadd.f32 %v487, %v830
    %v847 = vadd.f32 %v488, %v831
    %v848 = vadd.f32 %v489, %v832
    %v849 = vadd.f32 %v490, %v833
    %v850 = vadd.f32 %v491, %v834
    %v851 = vadd.f32 %v492, %v835
    %v852 = vadd.f32 %v836, %v837
    %v853 = vadd.f32 %v852, %v838
    %v854 = vadd.f32 %v853, %v839
    %v855 = vadd.f32 %v854, %v840
    %v856 = vadd.f32 %v855, %v841
    %v857 = vadd.f32 %v856, %v842
    %v858 = vadd.f32 %v857, %v843
    %v859 = vadd.f32 %v858, %v844
    %v860 = vadd.f32 %v859, %v845
    %v861 = vadd.f32 %v860, %v846
    %v862 = vadd.f32 %v861, %v847
    %v863 = vadd.f32 %v862, %v848
    %v864 = vadd.f32 %v863, %v849
    %v865 = vadd.f32 %v864, %v850
    %v866 = vadd.f32 %v865, %v851
    %867 = vadd.xlane.f32.xlu0 %v866
    %v868 = vpop.xlane.xlu0 %867
    %v869 = vrot.slane %v868, 4
    %v870 = vadd.f32 %v868, %v869
    %v871 = vrot.slane %v870, 2
    %v872 = vadd.f32 %v870, %v871
    %v873 = vrot.slane %v872, 1
    %v874 = vadd.f32 %v872, %v873
    %s875 = vtos %v874
    %v876 = vstv %s875
    %877 = vst [vmem:[#allocation2] sm:$0xff] %v876
    // Predicated region
    $region10: #{tpu_custom_call.1} parent=1 // pred_check
      _
    $region11: #{tpu_custom_call.1} parent=1 // pred_check_branch
      %879 = sbr.rel (0) target = $region13
    $region12: #{tpu_custom_call.1} parent=1 // pred_region
      %s880 = sadd.s32 0, 0
      %882 = vsyncadd [#allocation3], 0
      %s883 = smul.addr %s880, 8
      %s884 = scalar_lea.hbm %s2, %s883
      %s886 = sshll.u32 [#allocation2], 4
      %s887 = int_to_ptr.vmem [resolvable:$true] %s886
      %s888 = sshll.u32 %s884, 4
      %s889 = int_to_ptr.hbm [resolvable:$true] %s888
      %891 = dma.vmem_to_hbm [thread:$0]  %s887, 128, %s889, [#allocation3]
    $region13: #{tpu_custom_call.1} parent=1 // pred_fallthru
      _
    // Predicated region
    $region14: #{tpu_custom_call.1} parent=1 // pred_check
      _
    $region15: #{tpu_custom_call.1} parent=1 // pred_check_branch
      %893 = sbr.rel (0) target = $region17
    $region16: #{tpu_custom_call.1} parent=1 // pred_region
      %895 = dma.done [#allocation3], 128
    $region17: #{tpu_custom_call.1} parent=1 // pred_fallthru
      _
    %896 = vsyncpa [#allocation3], 1

// kernel: tpu_custom_call.1
$region0: #{tpu_custom_call.1}
  #allocation0 [shape = 'u32[]', space=smem, size = 0x4, offset = 0x4, fixed_abs, tag = 'smem constant byte address 0x4 - core index']
  #allocation1 [shape = 'u32[72,128]{1,0:T(1,128)}', space=vmem, size = 0x9000, scoped, tag = 'internal scratch']
  %s0 = inlined_call_operand.vmem [shape: bf16[2,128,16], index: 0, kind: input, shape index: {}]
  %s1 = inlined_call_operand.vmem [shape: bf16[16,256], index: 1, kind: input, shape index: {}]
  %s2 = inlined_call_operand.hbm [shape: f32[1,8,128], index: 2, kind: output, shape index: {}]
  %s3 = sld [smem:[#allocation0]]
  $region18: #{tpu_custom_call.1} parent=0
    _
  %s5 = ssub.s32 1, %s3
  %s6 = scalar_select 0, %s5, %s3
  $region1: #{tpu_custom_call.1} parent=0
    #allocation2 [shape = 'u8[4096]{0}', space=vmem, size = 0x1000, scoped, tag = 'output window, operand 0, single buffered']
    #allocation3 [shape = 's32[1]{0}', space=sflag, size = 0x4, scoped, tag = 'scoped memory for tpu_custom_call.1']
    %7 = vsyncpa [#allocation3], 0
    // Predicated region
    $region2: #{tpu_custom_call.1} parent=1 // pred_check
      _
    $region3: #{tpu_custom_call.1} parent=1 // pred_check_branch
      %9 = sbr.rel (0) target = $region5
    $region4: #{tpu_custom_call.1} parent=1 // pred_region
      _
    $region5: #{tpu_custom_call.1} parent=1 // pred_fallthru
      _
    // Predicated region
    $region6: #{tpu_custom_call.1} parent=1 // pred_check
      _
    $region7: #{tpu_custom_call.1} parent=1 // pred_check_branch
      %11 = sbr.rel (0) target = $region9
    $region8: #{tpu_custom_call.1} parent=1 // pred_region
      _
    $region9: #{tpu_custom_call.1} parent=1 // pred_fallthru
      _
    %s12 = sadd.s32 0, 0
    %v14 = vld [vmem:[%s0] sm:$0xf]
    %v15 = vld [vmem:[%s0 + $0x4] sm:$0xf]
    %v16 = vld [vmem:[%s0 + $0x8] sm:$0xf]
    %v17 = vld [vmem:[%s0 + $0xc] sm:$0xf]
    %v18 = vld [vmem:[%s0 + $0x10] sm:$0xf]
    %v19 = vld [vmem:[%s0 + $0x14] sm:$0xf]
    %v20 = vld [vmem:[%s0 + $0x18] sm:$0xf]
    %v21 = vld [vmem:[%s0 + $0x1c] sm:$0xf]
    %v22 = vld [vmem:[%s0 + $0x20] sm:$0xf]
    %v23 = vld [vmem:[%s0 + $0x24] sm:$0xf]
    %v24 = vld [vmem:[%s0 + $0x28] sm:$0xf]
    %v25 = vld [vmem:[%s0 + $0x2c] sm:$0xf]
    %v26 = vld [vmem:[%s0 + $0x30] sm:$0xf]
    %v27 = vld [vmem:[%s0 + $0x34] sm:$0xf]
    %v28 = vld [vmem:[%s0 + $0x38] sm:$0xf]
    %v29 = vld [vmem:[%s0 + $0x3c] sm:$0xf]
    %v30 = vld [vmem:[%s0 + $0x40] sm:$0xf]
    %v31 = vld [vmem:[%s0 + $0x44] sm:$0xf]
    %v32 = vld [vmem:[%s0 + $0x48] sm:$0xf]
    %v33 = vld [vmem:[%s0 + $0x4c] sm:$0xf]
    %v34 = vld [vmem:[%s0 + $0x50] sm:$0xf]
    %v35 = vld [vmem:[%s0 + $0x54] sm:$0xf]
    %v36 = vld [vmem:[%s0 + $0x58] sm:$0xf]
    %v37 = vld [vmem:[%s0 + $0x5c] sm:$0xf]
    %v38 = vld [vmem:[%s0 + $0x60] sm:$0xf]
    %v39 = vld [vmem:[%s0 + $0x64] sm:$0xf]
    %v40 = vld [vmem:[%s0 + $0x68] sm:$0xf]
    %v41 = vld [vmem:[%s0 + $0x6c] sm:$0xf]
    %v42 = vld [vmem:[%s0 + $0x70] sm:$0xf]
    %v43 = vld [vmem:[%s0 + $0x74] sm:$0xf]
    %v44 = vld [vmem:[%s0 + $0x78] sm:$0xf]
    %v45 = vld [vmem:[%s0 + $0x7c] sm:$0xf]
    %v46 = vld [vmem:[%s1] sm:$0xff]
    %v47 = vld [vmem:[%s1 + $0x8] sm:$0xff]
    %v80 = vunpack.c.l.b16 %v14
    %v81 = vunpack.c.l.b16 %v15
    %v82 = vunpack.c.l.b16 %v16
    %v83 = vunpack.c.l.b16 %v17
    %v84 = vunpack.c.l.b16 %v18
    %v85 = vunpack.c.l.b16 %v19
    %v86 = vunpack.c.l.b16 %v20
    %v87 = vunpack.c.l.b16 %v21
    %v88 = vunpack.c.l.b16 %v22
    %v89 = vunpack.c.l.b16 %v23
    %v90 = vunpack.c.l.b16 %v24
    %v91 = vunpack.c.l.b16 %v25
    %v92 = vunpack.c.l.b16 %v26
    %v93 = vunpack.c.l.b16 %v27
    %v94 = vunpack.c.l.b16 %v28
    %v95 = vunpack.c.l.b16 %v29
    %v96 = vunpack.c.l.b16 %v30
    %v97 = vunpack.c.l.b16 %v31
    %v98 = vunpack.c.l.b16 %v32
    %v99 = vunpack.c.l.b16 %v33
    %v100 = vunpack.c.l.b16 %v34
    %v101 = vunpack.c.l.b16 %v35
    %v102 = vunpack.c.l.b16 %v36
    %v103 = vunpack.c.l.b16 %v37
    %v104 = vunpack.c.l.b16 %v38
    %v105 = vunpack.c.l.b16 %v39
    %v106 = vunpack.c.l.b16 %v40
    %v107 = vunpack.c.l.b16 %v41
    %v108 = vunpack.c.l.b16 %v42
    %v109 = vunpack.c.l.b16 %v43
    %v110 = vunpack.c.l.b16 %v44
    %v111 = vunpack.c.l.b16 %v45
    %v112 = vpack.c.b16 %v81, %v80
    %v113 = vpack.c.b16 %v83, %v82
    %v114 = vpack.c.b16 %v85, %v84
    %v115 = vpack.c.b16 %v87, %v86
    %v116 = vpack.c.b16 %v89, %v88
    %v117 = vpack.c.b16 %v91, %v90
    %v118 = vpack.c.b16 %v93, %v92
    %v119 = vpack.c.b16 %v95, %v94
    %v120 = vpack.c.b16 %v97, %v96
    %v121 = vpack.c.b16 %v99, %v98
    %v122 = vpack.c.b16 %v101, %v100
    %v123 = vpack.c.b16 %v103, %v102
    %v124 = vpack.c.b16 %v105, %v104
    %v125 = vpack.c.b16 %v107, %v106
    %v126 = vpack.c.b16 %v109, %v108
    %v127 = vpack.c.b16 %v111, %v110
    %v130 = vunpack.c.l.b16 %v46
    %v131 = vunpack.c.h.b16 %v46
    %v132 = vunpack.c.l.b16 %v47
    %v133 = vunpack.c.h.b16 %v47
    %v134 = vpack.c.b16 %v132, %v130
    %v135 = vpack.c.b16 %v133, %v131
    %vm138 = vcmask 130048
    %v140 = vsel %vm138, %v112, 0
    %v143 = vsel %vm138, %v113, 0
    %v146 = vsel %vm138, %v114, 0
    %v149 = vsel %vm138, %v115, 0
    %v152 = vsel %vm138, %v116, 0
    %v155 = vsel %vm138, %v117, 0
    %v158 = vsel %vm138, %v118, 0
    %v161 = vsel %vm138, %v119, 0
    %v164 = vsel %vm138, %v120, 0
    %v167 = vsel %vm138, %v121, 0
    %v170 = vsel %vm138, %v122, 0
    %v173 = vsel %vm138, %v123, 0
    %v176 = vsel %vm138, %v124, 0
    %v179 = vsel %vm138, %v125, 0
    %v182 = vsel %vm138, %v126, 0
    %v185 = vsel %vm138, %v127, 0
    %187 = vmatpush.bf16.msra.mxu0 0
    %188 = vmatpush.bf16.msra.mxu0 0
    %189 = vmatpush.bf16.msra.mxu0 0
    %190 = vmatpush.bf16.msra.mxu0 0
    %191 = vmatpush.bf16.msra.mxu0 0
    %192 = vmatpush.bf16.msra.mxu0 0
    %193 = vmatpush.bf16.msra.mxu0 0
    %194 = vmatpush.bf16.msra.mxu0 %v134
    %195 = vmatmul.bf16.gmra.mxu0 %v140
    %v196 = vpop.f32.mrf.mxu0
    %v197 = vadd.f32 0.0, %v196
    %v198 = vpop.f32.mrf.mxu0
    %v199 = vadd.f32 0.0, %v198
    %200 = vmatmul.bf16.gmra.mxu0 %v143
    %v201 = vpop.f32.mrf.mxu0
    %v202 = vadd.f32 0.0, %v201
    %v203 = vpop.f32.mrf.mxu0
    %v204 = vadd.f32 0.0, %v203
    %205 = vmatmul.bf16.gmra.mxu0 %v146
    %v206 = vpop.f32.mrf.mxu0
    %v207 = vadd.f32 0.0, %v206
    %v208 = vpop.f32.mrf.mxu0
    %v209 = vadd.f32 0.0, %v208
    %210 = vmatmul.bf16.gmra.mxu0 %v149
    %v211 = vpop.f32.mrf.mxu0
    %v212 = vadd.f32 0.0, %v211
    %v213 = vpop.f32.mrf.mxu0
    %v214 = vadd.f32 0.0, %v213
    %215 = vmatmul.bf16.gmra.mxu0 %v152
    %v216 = vpop.f32.mrf.mxu0
    %v217 = vadd.f32 0.0, %v216
    %v218 = vpop.f32.mrf.mxu0
    %v219 = vadd.f32 0.0, %v218
    %220 = vmatmul.bf16.gmra.mxu0 %v155
    %v221 = vpop.f32.mrf.mxu0
    %v222 = vadd.f32 0.0, %v221
    %v223 = vpop.f32.mrf.mxu0
    %v224 = vadd.f32 0.0, %v223
    %225 = vmatmul.bf16.gmra.mxu0 %v158
    %v226 = vpop.f32.mrf.mxu0
    %v227 = vadd.f32 0.0, %v226
    %v228 = vpop.f32.mrf.mxu0
    %v229 = vadd.f32 0.0, %v228
    %230 = vmatmul.bf16.gmra.mxu0 %v161
    %v231 = vpop.f32.mrf.mxu0
    %v232 = vadd.f32 0.0, %v231
    %v233 = vpop.f32.mrf.mxu0
    %v234 = vadd.f32 0.0, %v233
    %235 = vmatmul.bf16.gmra.mxu0 %v164
    %v236 = vpop.f32.mrf.mxu0
    %v237 = vadd.f32 0.0, %v236
    %v238 = vpop.f32.mrf.mxu0
    %v239 = vadd.f32 0.0, %v238
    %240 = vmatmul.bf16.gmra.mxu0 %v167
    %v241 = vpop.f32.mrf.mxu0
    %v242 = vadd.f32 0.0, %v241
    %v243 = vpop.f32.mrf.mxu0
    %v244 = vadd.f32 0.0, %v243
    %245 = vmatmul.bf16.gmra.mxu0 %v170
    %v246 = vpop.f32.mrf.mxu0
    %v247 = vadd.f32 0.0, %v246
    %v248 = vpop.f32.mrf.mxu0
    %v249 = vadd.f32 0.0, %v248
    %250 = vmatmul.bf16.gmra.mxu0 %v173
    %v251 = vpop.f32.mrf.mxu0
    %v252 = vadd.f32 0.0, %v251
    %v253 = vpop.f32.mrf.mxu0
    %v254 = vadd.f32 0.0, %v253
    %255 = vmatmul.bf16.gmra.mxu0 %v176
    %v256 = vpop.f32.mrf.mxu0
    %v257 = vadd.f32 0.0, %v256
    %v258 = vpop.f32.mrf.mxu0
    %v259 = vadd.f32 0.0, %v258
    %260 = vmatmul.bf16.gmra.mxu0 %v179
    %v261 = vpop.f32.mrf.mxu0
    %v262 = vadd.f32 0.0, %v261
    %v263 = vpop.f32.mrf.mxu0
    %v264 = vadd.f32 0.0, %v263
    %265 = vmatmul.bf16.gmra.mxu0 %v182
    %v266 = vpop.f32.mrf.mxu0
    %v267 = vadd.f32 0.0, %v266
    %v268 = vpop.f32.mrf.mxu0
    %v269 = vadd.f32 0.0, %v268
    %270 = vmatmul.bf16.gmra.mxu0 %v185
    %v271 = vpop.f32.mrf.mxu0
    %v272 = vadd.f32 0.0, %v271
    %v273 = vpop.f32.mrf.mxu0
    %v274 = vadd.f32 0.0, %v273
    %275 = vdwg.mxu0
    %276 = vmatpush.bf16.msra.mxu0 0
    %277 = vmatpush.bf16.msra.mxu0 0
    %278 = vmatpush.bf16.msra.mxu0 0
    %279 = vmatpush.bf16.msra.mxu0 0
    %280 = vmatpush.bf16.msra.mxu0 0
    %281 = vmatpush.bf16.msra.mxu0 0
    %282 = vmatpush.bf16.msra.mxu0 0
    %283 = vmatpush.bf16.msra.mxu0 %v135
    %284 = vmatmul.bf16.gmra.mxu0 %v140
    %v285 = vpop.f32.mrf.mxu0
    %v286 = vadd.f32 0.0, %v285
    %v287 = vpop.f32.mrf.mxu0
    %v288 = vadd.f32 0.0, %v287
    %289 = vmatmul.bf16.gmra.mxu0 %v143
    %v290 = vpop.f32.mrf.mxu0
    %v291 = vadd.f32 0.0, %v290
    %v292 = vpop.f32.mrf.mxu0
    %v293 = vadd.f32 0.0, %v292
    %294 = vmatmul.bf16.gmra.mxu0 %v146
    %v295 = vpop.f32.mrf.mxu0
    %v296 = vadd.f32 0.0, %v295
    %v297 = vpop.f32.mrf.mxu0
    %v298 = vadd.f32 0.0, %v297
    %299 = vmatmul.bf16.gmra.mxu0 %v149
    %v300 = vpop.f32.mrf.mxu0
    %v301 = vadd.f32 0.0, %v300
    %v302 = vpop.f32.mrf.mxu0
    %v303 = vadd.f32 0.0, %v302
    %304 = vmatmul.bf16.gmra.mxu0 %v152
    %v305 = vpop.f32.mrf.mxu0
    %v306 = vadd.f32 0.0, %v305
    %v307 = vpop.f32.mrf.mxu0
    %v308 = vadd.f32 0.0, %v307
    %309 = vmatmul.bf16.gmra.mxu0 %v155
    %v310 = vpop.f32.mrf.mxu0
    %v311 = vadd.f32 0.0, %v310
    %v312 = vpop.f32.mrf.mxu0
    %v313 = vadd.f32 0.0, %v312
    %314 = vmatmul.bf16.gmra.mxu0 %v158
    %v315 = vpop.f32.mrf.mxu0
    %v316 = vadd.f32 0.0, %v315
    %v317 = vpop.f32.mrf.mxu0
    %v318 = vadd.f32 0.0, %v317
    %319 = vmatmul.bf16.gmra.mxu0 %v161
    %v320 = vpop.f32.mrf.mxu0
    %v321 = vadd.f32 0.0, %v320
    %v322 = vpop.f32.mrf.mxu0
    %v323 = vadd.f32 0.0, %v322
    %324 = vmatmul.bf16.gmra.mxu0 %v164
    %v325 = vpop.f32.mrf.mxu0
    %v326 = vadd.f32 0.0, %v325
    %v327 = vpop.f32.mrf.mxu0
    %v328 = vadd.f32 0.0, %v327
    %329 = vmatmul.bf16.gmra.mxu0 %v167
    %v330 = vpop.f32.mrf.mxu0
    %v331 = vadd.f32 0.0, %v330
    %v332 = vpop.f32.mrf.mxu0
    %v333 = vadd.f32 0.0, %v332
    %334 = vmatmul.bf16.gmra.mxu0 %v170
    %v335 = vpop.f32.mrf.mxu0
    %v336 = vadd.f32 0.0, %v335
    %v337 = vpop.f32.mrf.mxu0
    %v338 = vadd.f32 0.0, %v337
    %339 = vmatmul.bf16.gmra.mxu0 %v173
    %v340 = vpop.f32.mrf.mxu0
    %v341 = vadd.f32 0.0, %v340
    %v342 = vpop.f32.mrf.mxu0
    %v343 = vadd.f32 0.0, %v342
    %344 = vmatmul.bf16.gmra.mxu0 %v176
    %v345 = vpop.f32.mrf.mxu0
    %v346 = vadd.f32 0.0, %v345
    %v347 = vpop.f32.mrf.mxu0
    %v348 = vadd.f32 0.0, %v347
    %349 = vmatmul.bf16.gmra.mxu0 %v179
    %v350 = vpop.f32.mrf.mxu0
    %v351 = vadd.f32 0.0, %v350
    %v352 = vpop.f32.mrf.mxu0
    %v353 = vadd.f32 0.0, %v352
    %354 = vmatmul.bf16.gmra.mxu0 %v182
    %v355 = vpop.f32.mrf.mxu0
    %v356 = vadd.f32 0.0, %v355
    %v357 = vpop.f32.mrf.mxu0
    %v358 = vadd.f32 0.0, %v357
    %359 = vmatmul.bf16.gmra.mxu0 %v185
    %v360 = vpop.f32.mrf.mxu0
    %v361 = vadd.f32 0.0, %v360
    %v362 = vpop.f32.mrf.mxu0
    %v363 = vadd.f32 0.0, %v362
    %364 = vdwg.mxu0
    %v365 = vmul.f32 %v197, %v197
    %v366 = vmul.f32 %v199, %v199
    %v367 = vmul.f32 %v202, %v202
    %v368 = vmul.f32 %v204, %v204
    %v369 = vmul.f32 %v207, %v207
    %v370 = vmul.f32 %v209, %v209
    %v371 = vmul.f32 %v212, %v212
    %v372 = vmul.f32 %v214, %v214
    %v373 = vmul.f32 %v217, %v217
    %v374 = vmul.f32 %v219, %v219
    %v375 = vmul.f32 %v222, %v222
    %v376 = vmul.f32 %v224, %v224
    %v377 = vmul.f32 %v227, %v227
    %v378 = vmul.f32 %v229, %v229
    %v379 = vmul.f32 %v232, %v232
    %v380 = vmul.f32 %v234, %v234
    %v381 = vmul.f32 %v286, %v286
    %v382 = vmul.f32 %v288, %v288
    %v383 = vmul.f32 %v291, %v291
    %v384 = vmul.f32 %v293, %v293
    %v385 = vmul.f32 %v296, %v296
    %v386 = vmul.f32 %v298, %v298
    %v387 = vmul.f32 %v301, %v301
    %v388 = vmul.f32 %v303, %v303
    %v389 = vmul.f32 %v306, %v306
    %v390 = vmul.f32 %v308, %v308
    %v391 = vmul.f32 %v311, %v311
    %v392 = vmul.f32 %v313, %v313
    %v393 = vmul.f32 %v316, %v316
    %v394 = vmul.f32 %v318, %v318
    %v395 = vmul.f32 %v321, %v321
    %v396 = vmul.f32 %v323, %v323
    %v397 = vadd.f32 %v365, %v381
    %v398 = vadd.f32 %v366, %v382
    %v399 = vadd.f32 %v367, %v383
    %v400 = vadd.f32 %v368, %v384
    %v401 = vadd.f32 %v369, %v385
    %v402 = vadd.f32 %v370, %v386
    %v403 = vadd.f32 %v371, %v387
    %v404 = vadd.f32 %v372, %v388
    %v405 = vadd.f32 %v373, %v389
    %v406 = vadd.f32 %v374, %v390
    %v407 = vadd.f32 %v375, %v391
    %v408 = vadd.f32 %v376, %v392
    %v409 = vadd.f32 %v377, %v393
    %v410 = vadd.f32 %v378, %v394
    %v411 = vadd.f32 %v379, %v395
    %v412 = vadd.f32 %v380, %v396
    %v413 = vmul.f32 %v237, %v237
    %v414 = vmul.f32 %v239, %v239
    %v415 = vmul.f32 %v242, %v242
    %v416 = vmul.f32 %v244, %v244
    %v417 = vmul.f32 %v247, %v247
    %v418 = vmul.f32 %v249, %v249
    %v419 = vmul.f32 %v252, %v252
    %v420 = vmul.f32 %v254, %v254
    %v421 = vmul.f32 %v257, %v257
    %v422 = vmul.f32 %v259, %v259
    %v423 = vmul.f32 %v262, %v262
    %v424 = vmul.f32 %v264, %v264
    %v425 = vmul.f32 %v267, %v267
    %v426 = vmul.f32 %v269, %v269
    %v427 = vmul.f32 %v272, %v272
    %v428 = vmul.f32 %v274, %v274
    %v429 = vmul.f32 %v326, %v326
    %v430 = vmul.f32 %v328, %v328
    %v431 = vmul.f32 %v331, %v331
    %v432 = vmul.f32 %v333, %v333
    %v433 = vmul.f32 %v336, %v336
    %v434 = vmul.f32 %v338, %v338
    %v435 = vmul.f32 %v341, %v341
    %v436 = vmul.f32 %v343, %v343
    %v437 = vmul.f32 %v346, %v346
    %v438 = vmul.f32 %v348, %v348
    %v439 = vmul.f32 %v351, %v351
    %v440 = vmul.f32 %v353, %v353
    %v441 = vmul.f32 %v356, %v356
    %v442 = vmul.f32 %v358, %v358
    %v443 = vmul.f32 %v361, %v361
    %v444 = vmul.f32 %v363, %v363
    %v445 = vadd.f32 %v413, %v429
    %v446 = vadd.f32 %v414, %v430
    %v447 = vadd.f32 %v415, %v431
    %v448 = vadd.f32 %v416, %v432
    %v449 = vadd.f32 %v417, %v433
    %v450 = vadd.f32 %v418, %v434
    %v451 = vadd.f32 %v419, %v435
    %v452 = vadd.f32 %v420, %v436
    %v453 = vadd.f32 %v421, %v437
    %v454 = vadd.f32 %v422, %v438
    %v455 = vadd.f32 %v423, %v439
    %v456 = vadd.f32 %v424, %v440
    %v457 = vadd.f32 %v425, %v441
    %v458 = vadd.f32 %v426, %v442
    %v459 = vadd.f32 %v427, %v443
    %v460 = vadd.f32 %v428, %v444
    %v461 = vsub.f32 %v397, %v445
    %v462 = vsub.f32 %v398, %v446
    %v463 = vsub.f32 %v399, %v447
    %v464 = vsub.f32 %v400, %v448
    %v465 = vsub.f32 %v401, %v449
    %v466 = vsub.f32 %v402, %v450
    %v467 = vsub.f32 %v403, %v451
    %v468 = vsub.f32 %v404, %v452
    %v469 = vsub.f32 %v405, %v453
    %v470 = vsub.f32 %v406, %v454
    %v471 = vsub.f32 %v407, %v455
    %v472 = vsub.f32 %v408, %v456
    %v473 = vsub.f32 %v409, %v457
    %v474 = vsub.f32 %v410, %v458
    %v475 = vsub.f32 %v411, %v459
    %v476 = vsub.f32 %v412, %v460
    %v477 = vand.u32 2147483647, %v461
    %v478 = vand.u32 2147483647, %v462
    %v479 = vand.u32 2147483647, %v463
    %v480 = vand.u32 2147483647, %v464
    %v481 = vand.u32 2147483647, %v465
    %v482 = vand.u32 2147483647, %v466
    %v483 = vand.u32 2147483647, %v467
    %v484 = vand.u32 2147483647, %v468
    %v485 = vand.u32 2147483647, %v469
    %v486 = vand.u32 2147483647, %v470
    %v487 = vand.u32 2147483647, %v471
    %v488 = vand.u32 2147483647, %v472
    %v489 = vand.u32 2147483647, %v473
    %v490 = vand.u32 2147483647, %v474
    %v491 = vand.u32 2147483647, %v475
    %v492 = vand.u32 2147483647, %v476
    %v493 = vadd.f32 %v445, 1e-07
    %v494 = vadd.f32 %v446, 1e-07
    %v495 = vadd.f32 %v447, 1e-07
    %v496 = vadd.f32 %v448, 1e-07
    %v497 = vadd.f32 %v449, 1e-07
    %v498 = vadd.f32 %v450, 1e-07
    %v499 = vadd.f32 %v451, 1e-07
    %v500 = vadd.f32 %v452, 1e-07
    %v501 = vadd.f32 %v453, 1e-07
    %v502 = vadd.f32 %v454, 1e-07
    %v503 = vadd.f32 %v455, 1e-07
    %v504 = vadd.f32 %v456, 1e-07
    %v505 = vadd.f32 %v457, 1e-07
    %v506 = vadd.f32 %v458, 1e-07
    %v507 = vadd.f32 %v459, 1e-07
    %v508 = vadd.f32 %v460, 1e-07
    %v509 = vadd.f32 %v397, 1e-07
    %v510 = vadd.f32 %v398, 1e-07
    %v511 = vadd.f32 %v399, 1e-07
    %v512 = vadd.f32 %v400, 1e-07
    %v513 = vadd.f32 %v401, 1e-07
    %v514 = vadd.f32 %v402, 1e-07
    %v515 = vadd.f32 %v403, 1e-07
    %v516 = vadd.f32 %v404, 1e-07
    %v517 = vadd.f32 %v405, 1e-07
    %v518 = vadd.f32 %v406, 1e-07
    %v519 = vadd.f32 %v407, 1e-07
    %v520 = vadd.f32 %v408, 1e-07
    %v521 = vadd.f32 %v409, 1e-07
    %v522 = vadd.f32 %v410, 1e-07
    %v523 = vadd.f32 %v411, 1e-07
    %v524 = vadd.f32 %v412, 1e-07
    %v525 = vrcp.pop %v509
    %v526 = vmul.f32 %v509, %v525
    %v527 = vsub.f32 1.0, %v526
    %v528 = vmul.f32 %v525, %v527
    %v529 = vadd.f32 %v525, %v528
    %vm530 = vweird.f32 %v509
    %vm531 = vweird.f32 %v525
    %vm532 = vmor %vm530, %vm531
    %v533 = vsel %vm532, %v525, %v529
    %v534 = vand.u32 2147483647, %v509
    %vm535 = vcmp.eq.f32.partialorder %v534, 8.507059e+37
    %v536 = vand.u32 %v509, 2147483648
    %v537 = vor.u32 1.1754944e-38, %v536
    %v538 = vsel %vm535, %v537, %v533
    %v539 = vmul.f32 %v493, %v538
    %v540 = vrcp.pop %v510
    %v541 = vmul.f32 %v510, %v540
    %v542 = vsub.f32 1.0, %v541
    %v543 = vmul.f32 %v540, %v542
    %v544 = vadd.f32 %v540, %v543
    %vm545 = vweird.f32 %v510
    %vm546 = vweird.f32 %v540
    %vm547 = vmor %vm545, %vm546
    %v548 = vsel %vm547, %v540, %v544
    %v549 = vand.u32 2147483647, %v510
    %vm550 = vcmp.eq.f32.partialorder %v549, 8.507059e+37
    %v551 = vand.u32 %v510, 2147483648
    %v552 = vor.u32 1.1754944e-38, %v551
    %v553 = vsel %vm550, %v552, %v548
    %v554 = vmul.f32 %v494, %v553
    %v555 = vrcp.pop %v511
    %v556 = vmul.f32 %v511, %v555
    %v557 = vsub.f32 1.0, %v556
    %v558 = vmul.f32 %v555, %v557
    %v559 = vadd.f32 %v555, %v558
    %vm560 = vweird.f32 %v511
    %vm561 = vweird.f32 %v555
    %vm562 = vmor %vm560, %vm561
    %v563 = vsel %vm562, %v555, %v559
    %v564 = vand.u32 2147483647, %v511
    %vm565 = vcmp.eq.f32.partialorder %v564, 8.507059e+37
    %v566 = vand.u32 %v511, 2147483648
    %v567 = vor.u32 1.1754944e-38, %v566
    %v568 = vsel %vm565, %v567, %v563
    %v569 = vmul.f32 %v495, %v568
    %v570 = vrcp.pop %v512
    %v571 = vmul.f32 %v512, %v570
    %v572 = vsub.f32 1.0, %v571
    %v573 = vmul.f32 %v570, %v572
    %v574 = vadd.f32 %v570, %v573
    %vm575 = vweird.f32 %v512
    %vm576 = vweird.f32 %v570
    %vm577 = vmor %vm575, %vm576
    %v578 = vsel %vm577, %v570, %v574
    %v579 = vand.u32 2147483647, %v512
    %vm580 = vcmp.eq.f32.partialorder %v579, 8.507059e+37
    %v581 = vand.u32 %v512, 2147483648
    %v582 = vor.u32 1.1754944e-38, %v581
    %v583 = vsel %vm580, %v582, %v578
    %v584 = vmul.f32 %v496, %v583
    %v585 = vrcp.pop %v513
    %v586 = vmul.f32 %v513, %v585
    %v587 = vsub.f32 1.0, %v586
    %v588 = vmul.f32 %v585, %v587
    %v589 = vadd.f32 %v585, %v588
    %vm590 = vweird.f32 %v513
    %vm591 = vweird.f32 %v585
    %vm592 = vmor %vm590, %vm591
    %v593 = vsel %vm592, %v585, %v589
    %v594 = vand.u32 2147483647, %v513
    %vm595 = vcmp.eq.f32.partialorder %v594, 8.507059e+37
    %v596 = vand.u32 %v513, 2147483648
    %v597 = vor.u32 1.1754944e-38, %v596
    %v598 = vsel %vm595, %v597, %v593
    %v599 = vmul.f32 %v497, %v598
    %v600 = vrcp.pop %v514
    %v601 = vmul.f32 %v514, %v600
    %v602 = vsub.f32 1.0, %v601
    %v603 = vmul.f32 %v600, %v602
    %v604 = vadd.f32 %v600, %v603
    %vm605 = vweird.f32 %v514
    %vm606 = vweird.f32 %v600
    %vm607 = vmor %vm605, %vm606
    %v608 = vsel %vm607, %v600, %v604
    %v609 = vand.u32 2147483647, %v514
    %vm610 = vcmp.eq.f32.partialorder %v609, 8.507059e+37
    %v611 = vand.u32 %v514, 2147483648
    %v612 = vor.u32 1.1754944e-38, %v611
    %v613 = vsel %vm610, %v612, %v608
    %v614 = vmul.f32 %v498, %v613
    %v615 = vrcp.pop %v515
    %v616 = vmul.f32 %v515, %v615
    %v617 = vsub.f32 1.0, %v616
    %v618 = vmul.f32 %v615, %v617
    %v619 = vadd.f32 %v615, %v618
    %vm620 = vweird.f32 %v515
    %vm621 = vweird.f32 %v615
    %vm622 = vmor %vm620, %vm621
    %v623 = vsel %vm622, %v615, %v619
    %v624 = vand.u32 2147483647, %v515
    %vm625 = vcmp.eq.f32.partialorder %v624, 8.507059e+37
    %v626 = vand.u32 %v515, 2147483648
    %v627 = vor.u32 1.1754944e-38, %v626
    %v628 = vsel %vm625, %v627, %v623
    %v629 = vmul.f32 %v499, %v628
    %v630 = vrcp.pop %v516
    %v631 = vmul.f32 %v516, %v630
    %v632 = vsub.f32 1.0, %v631
    %v633 = vmul.f32 %v630, %v632
    %v634 = vadd.f32 %v630, %v633
    %vm635 = vweird.f32 %v516
    %vm636 = vweird.f32 %v630
    %vm637 = vmor %vm635, %vm636
    %v638 = vsel %vm637, %v630, %v634
    %v639 = vand.u32 2147483647, %v516
    %vm640 = vcmp.eq.f32.partialorder %v639, 8.507059e+37
    %v641 = vand.u32 %v516, 2147483648
    %v642 = vor.u32 1.1754944e-38, %v641
    %v643 = vsel %vm640, %v642, %v638
    %v644 = vmul.f32 %v500, %v643
    %v645 = vrcp.pop %v517
    %v646 = vmul.f32 %v517, %v645
    %v647 = vsub.f32 1.0, %v646
    %v648 = vmul.f32 %v645, %v647
    %v649 = vadd.f32 %v645, %v648
    %vm650 = vweird.f32 %v517
    %vm651 = vweird.f32 %v645
    %vm652 = vmor %vm650, %vm651
    %v653 = vsel %vm652, %v645, %v649
    %v654 = vand.u32 2147483647, %v517
    %vm655 = vcmp.eq.f32.partialorder %v654, 8.507059e+37
    %v656 = vand.u32 %v517, 2147483648
    %v657 = vor.u32 1.1754944e-38, %v656
    %v658 = vsel %vm655, %v657, %v653
    %v659 = vmul.f32 %v501, %v658
    %v660 = vrcp.pop %v518
    %v661 = vmul.f32 %v518, %v660
    %v662 = vsub.f32 1.0, %v661
    %v663 = vmul.f32 %v660, %v662
    %v664 = vadd.f32 %v660, %v663
    %vm665 = vweird.f32 %v518
    %vm666 = vweird.f32 %v660
    %vm667 = vmor %vm665, %vm666
    %v668 = vsel %vm667, %v660, %v664
    %v669 = vand.u32 2147483647, %v518
    %vm670 = vcmp.eq.f32.partialorder %v669, 8.507059e+37
    %v671 = vand.u32 %v518, 2147483648
    %v672 = vor.u32 1.1754944e-38, %v671
    %v673 = vsel %vm670, %v672, %v668
    %v674 = vmul.f32 %v502, %v673
    %v675 = vrcp.pop %v519
    %v676 = vmul.f32 %v519, %v675
    %v677 = vsub.f32 1.0, %v676
    %v678 = vmul.f32 %v675, %v677
    %v679 = vadd.f32 %v675, %v678
    %vm680 = vweird.f32 %v519
    %vm681 = vweird.f32 %v675
    %vm682 = vmor %vm680, %vm681
    %v683 = vsel %vm682, %v675, %v679
    %v684 = vand.u32 2147483647, %v519
    %vm685 = vcmp.eq.f32.partialorder %v684, 8.507059e+37
    %v686 = vand.u32 %v519, 2147483648
    %v687 = vor.u32 1.1754944e-38, %v686
    %v688 = vsel %vm685, %v687, %v683
    %v689 = vmul.f32 %v503, %v688
    %v690 = vrcp.pop %v520
    %v691 = vmul.f32 %v520, %v690
    %v692 = vsub.f32 1.0, %v691
    %v693 = vmul.f32 %v690, %v692
    %v694 = vadd.f32 %v690, %v693
    %vm695 = vweird.f32 %v520
    %vm696 = vweird.f32 %v690
    %vm697 = vmor %vm695, %vm696
    %v698 = vsel %vm697, %v690, %v694
    %v699 = vand.u32 2147483647, %v520
    %vm700 = vcmp.eq.f32.partialorder %v699, 8.507059e+37
    %v701 = vand.u32 %v520, 2147483648
    %v702 = vor.u32 1.1754944e-38, %v701
    %v703 = vsel %vm700, %v702, %v698
    %v704 = vmul.f32 %v504, %v703
    %v705 = vrcp.pop %v521
    %v706 = vmul.f32 %v521, %v705
    %v707 = vsub.f32 1.0, %v706
    %v708 = vmul.f32 %v705, %v707
    %v709 = vadd.f32 %v705, %v708
    %vm710 = vweird.f32 %v521
    %vm711 = vweird.f32 %v705
    %vm712 = vmor %vm710, %vm711
    %v713 = vsel %vm712, %v705, %v709
    %v714 = vand.u32 2147483647, %v521
    %vm715 = vcmp.eq.f32.partialorder %v714, 8.507059e+37
    %v716 = vand.u32 %v521, 2147483648
    %v717 = vor.u32 1.1754944e-38, %v716
    %v718 = vsel %vm715, %v717, %v713
    %v719 = vmul.f32 %v505, %v718
    %v720 = vrcp.pop %v522
    %v721 = vmul.f32 %v522, %v720
    %v722 = vsub.f32 1.0, %v721
    %v723 = vmul.f32 %v720, %v722
    %v724 = vadd.f32 %v720, %v723
    %vm725 = vweird.f32 %v522
    %vm726 = vweird.f32 %v720
    %vm727 = vmor %vm725, %vm726
    %v728 = vsel %vm727, %v720, %v724
    %v729 = vand.u32 2147483647, %v522
    %vm730 = vcmp.eq.f32.partialorder %v729, 8.507059e+37
    %v731 = vand.u32 %v522, 2147483648
    %v732 = vor.u32 1.1754944e-38, %v731
    %v733 = vsel %vm730, %v732, %v728
    %v734 = vmul.f32 %v506, %v733
    %v735 = vrcp.pop %v523
    %v736 = vmul.f32 %v523, %v735
    %v737 = vsub.f32 1.0, %v736
    %v738 = vmul.f32 %v735, %v737
    %v739 = vadd.f32 %v735, %v738
    %vm740 = vweird.f32 %v523
    %vm741 = vweird.f32 %v735
    %vm742 = vmor %vm740, %vm741
    %v743 = vsel %vm742, %v735, %v739
    %v744 = vand.u32 2147483647, %v523
    %vm745 = vcmp.eq.f32.partialorder %v744, 8.507059e+37
    %v746 = vand.u32 %v523, 2147483648
    %v747 = vor.u32 1.1754944e-38, %v746
    %v748 = vsel %vm745, %v747, %v743
    %v749 = vmul.f32 %v507, %v748
    %v750 = vrcp.pop %v524
    %v751 = vmul.f32 %v524, %v750
    %v752 = vsub.f32 1.0, %v751
    %v753 = vmul.f32 %v750, %v752
    %v754 = vadd.f32 %v750, %v753
    %vm755 = vweird.f32 %v524
    %vm756 = vweird.f32 %v750
    %vm757 = vmor %vm755, %vm756
    %v758 = vsel %vm757, %v750, %v754
    %v759 = vand.u32 2147483647, %v524
    %vm760 = vcmp.eq.f32.partialorder %v759, 8.507059e+37
    %v761 = vand.u32 %v524, 2147483648
    %v762 = vor.u32 1.1754944e-38, %v761
    %v763 = vsel %vm760, %v762, %v758
    %v764 = vmul.f32 %v508, %v763
    %v765 = vlog2.pop %v539
    %v766 = vmul.f32 %v765, 0.6931472
    %v767 = vlog2.pop %v554
    %v768 = vmul.f32 %v767, 0.6931472
    %v769 = vlog2.pop %v569
    %v770 = vmul.f32 %v769, 0.6931472
    %v771 = vlog2.pop %v584
    %v772 = vmul.f32 %v771, 0.6931472
    %v773 = vlog2.pop %v599
    %v774 = vmul.f32 %v773, 0.6931472
    %v775 = vlog2.pop %v614
    %v776 = vmul.f32 %v775, 0.6931472
    %v777 = vlog2.pop %v629
    %v778 = vmul.f32 %v777, 0.6931472
    %v779 = vlog2.pop %v644
    %v780 = vmul.f32 %v779, 0.6931472
    %v781 = vlog2.pop %v659
    %v782 = vmul.f32 %v781, 0.6931472
    %v783 = vlog2.pop %v674
    %v784 = vmul.f32 %v783, 0.6931472
    %v785 = vlog2.pop %v689
    %v786 = vmul.f32 %v785, 0.6931472
    %v787 = vlog2.pop %v704
    %v788 = vmul.f32 %v787, 0.6931472
    %v789 = vlog2.pop %v719
    %v790 = vmul.f32 %v789, 0.6931472
    %v791 = vlog2.pop %v734
    %v792 = vmul.f32 %v791, 0.6931472
    %v793 = vlog2.pop %v749
    %v794 = vmul.f32 %v793, 0.6931472
    %v795 = vlog2.pop %v764
    %v796 = vmul.f32 %v795, 0.6931472
    %v797 = vrcp.pop 0.6931472
    %v798 = vmul.f32 0.6931472, %v797
    %v799 = vsub.f32 1.0, %v798
    %v800 = vmul.f32 %v797, %v799
    %v801 = vadd.f32 %v797, %v800
    %vm802 = vweird.f32 %v797
    %v803 = vsel %vm802, %v797, %v801
    %v804 = vmul.f32 %v766, %v803
    %v805 = vmul.f32 %v768, %v803
    %v806 = vmul.f32 %v770, %v803
    %v807 = vmul.f32 %v772, %v803
    %v808 = vmul.f32 %v774, %v803
    %v809 = vmul.f32 %v776, %v803
    %v810 = vmul.f32 %v778, %v803
    %v811 = vmul.f32 %v780, %v803
    %v812 = vmul.f32 %v782, %v803
    %v813 = vmul.f32 %v784, %v803
    %v814 = vmul.f32 %v786, %v803
    %v815 = vmul.f32 %v788, %v803
    %v816 = vmul.f32 %v790, %v803
    %v817 = vmul.f32 %v792, %v803
    %v818 = vmul.f32 %v794, %v803
    %v819 = vmul.f32 %v796, %v803
    %v820 = vand.u32 2147483647, %v804
    %v821 = vand.u32 2147483647, %v805
    %v822 = vand.u32 2147483647, %v806
    %v823 = vand.u32 2147483647, %v807
    %v824 = vand.u32 2147483647, %v808
    %v825 = vand.u32 2147483647, %v809
    %v826 = vand.u32 2147483647, %v810
    %v827 = vand.u32 2147483647, %v811
    %v828 = vand.u32 2147483647, %v812
    %v829 = vand.u32 2147483647, %v813
    %v830 = vand.u32 2147483647, %v814
    %v831 = vand.u32 2147483647, %v815
    %v832 = vand.u32 2147483647, %v816
    %v833 = vand.u32 2147483647, %v817
    %v834 = vand.u32 2147483647, %v818
    %v835 = vand.u32 2147483647, %v819
    %v836 = vadd.f32 %v477, %v820
    %v837 = vadd.f32 %v478, %v821
    %v838 = vadd.f32 %v479, %v822
    %v839 = vadd.f32 %v480, %v823
    %v840 = vadd.f32 %v481, %v824
    %v841 = vadd.f32 %v482, %v825
    %v842 = vadd.f32 %v483, %v826
    %v843 = vadd.f32 %v484, %v827
    %v844 = vadd.f32 %v485, %v828
    %v845 = vadd.f32 %v486, %v829
    %v846 = vadd.f32 %v487, %v830
    %v847 = vadd.f32 %v488, %v831
    %v848 = vadd.f32 %v489, %v832
    %v849 = vadd.f32 %v490, %v833
    %v850 = vadd.f32 %v491, %v834
    %v851 = vadd.f32 %v492, %v835
    %v852 = vadd.f32 %v836, %v837
    %v853 = vadd.f32 %v852, %v838
    %v854 = vadd.f32 %v853, %v839
    %v855 = vadd.f32 %v854, %v840
    %v856 = vadd.f32 %v855, %v841
    %v857 = vadd.f32 %v856, %v842
    %v858 = vadd.f32 %v857, %v843
    %v859 = vadd.f32 %v858, %v844
    %v860 = vadd.f32 %v859, %v845
    %v861 = vadd.f32 %v860, %v846
    %v862 = vadd.f32 %v861, %v847
    %v863 = vadd.f32 %v862, %v848
    %v864 = vadd.f32 %v863, %v849
    %v865 = vadd.f32 %v864, %v850
    %v866 = vadd.f32 %v865, %v851
    %867 = vadd.xlane.f32.xlu0 %v866
    %v868 = vpop.xlane.xlu0 %867
    %v869 = vrot.slane %v868, 4
    %v870 = vadd.f32 %v868, %v869
    %v871 = vrot.slane %v870, 2
    %v872 = vadd.f32 %v870, %v871
    %v873 = vrot.slane %v872, 1
    %v874 = vadd.f32 %v872, %v873
    %s875 = vtos %v874
    %v876 = vstv %s875
    %877 = vst [vmem:[#allocation2] sm:$0xff] %v876
    // Predicated region
    $region10: #{tpu_custom_call.1} parent=1 // pred_check
      _
    $region11: #{tpu_custom_call.1} parent=1 // pred_check_branch
      %879 = sbr.rel (0) target = $region13
    $region12: #{tpu_custom_call.1} parent=1 // pred_region
      %s880 = sadd.s32 0, 0
      %882 = vsyncadd [#allocation3], 0
      %s883 = smul.addr %s880, 8
      %s884 = scalar_lea.hbm %s2, %s883
      %s886 = sshll.u32 [#allocation2], 4
      %s887 = int_to_ptr.vmem [resolvable:$true] %s886
      %s888 = sshll.u32 %s884, 4
      %s889 = int_to_ptr.hbm [resolvable:$true] %s888
      %891 = dma.vmem_to_hbm [thread:$0]  %s887, 128, %s889, [#allocation3]
    $region13: #{tpu_custom_call.1} parent=1 // pred_fallthru
      _
    // Predicated region
    $region14: #{tpu_custom_call.1} parent=1 // pred_check
      _
    $region15: #{tpu_custom_call.1} parent=1 // pred_check_branch
      %893 = sbr.rel (0) target = $region17
    $region16: #{tpu_custom_call.1} parent=1 // pred_region
      %895 = dma.done [#allocation3], 128
    $region17: #{tpu_custom_call.1} parent=1 // pred_fallthru
      _
    %896 = vsyncpa [#allocation3], 1

</llo_original>
